<compile_context>
chip_gen: v7x
topology: tpu7x:2x2x1
jax: 0.10.0
libtpu: 0.0.40
codegen_flags: <defaults>
</compile_context>

<pallas_src>
import jax
import jax.numpy as jnp
import numpy as np
from jax.experimental import pallas as pl
from jax.experimental.pallas import tpu as pltpu

# ---------------- configuration (small, deterministic) ----------------
B = 256        # batch (mapped to lanes inside the kernel)
TB = 256       # batch tile on the lane axis (multiple of 128; TB = B -> grid=(1,))
D = 32         # feature dim passed to SequenceINN(D)
H = 32         # subnet hidden width
N_BLOCKS = 4   # number of appended coupling blocks
CLAMP = 2.0    # soft clamp on log-scale (GLOW-style)
D_HALF = D // 2

assert B % TB == 0 and TB % 128 == 0


# ---------------- Pallas kernel: the whole sequential INN ----------------
def seq_inn_kernel(xT_ref, w1T_ref, b1_ref, w2T_ref, b2_ref, zT_ref, jac_ref):
    # Transposed (batch-on-lanes) layout:
    #   xT_ref:  (D, TB)
    #   w1T_ref: (N, H, D/2)   b1_ref: (N, H, 1)
    #   w2T_ref: (N, D, H)     b2_ref: (N, D, 1)
    #   zT_ref:  (D, TB)       jac_ref: (1, TB)
    # The two halves are carried separately; the half-flip permutation between
    # blocks becomes a variable swap (no concatenate / re-slice per block).
    x1 = xT_ref[:D_HALF, :]          # (D/2, TB)  sublane-aligned view
    x2 = xT_ref[D_HALF:, :]          # (D/2, TB)
    log_det = jnp.zeros((1, TB), jnp.float32)   # SequenceINN starts from zeros(batch)

    # Static unroll over the module_list (sequential, data-dependent chain —
    # matches the Python `for i in iterator:` loop of SequenceINN.forward()).
    for k in range(N_BLOCKS):
        w1T_k = w1T_ref[k]           # (H, D/2)
        b1_k = b1_ref[k]             # (H, 1)   broadcasts over lanes
        w2T_k = w2T_ref[k]           # (D, H)
        b2_k = b2_ref[k]             # (D, 1)

        # subnet(x1): two-layer MLP on the MXU, full 256-lane N per issue.
        h = jnp.maximum(
            jnp.dot(w1T_k, x1, preferred_element_type=jnp.float32) + b1_k, 0.0)   # (H, TB)
        st = jnp.dot(w2T_k, h, preferred_element_type=jnp.float32) + b2_k         # (D, TB)

        # s/t split is a sublane slice (offset D/2=16, 8-aligned) -> free view.
        s = CLAMP * jnp.tanh(st[:D_HALF, :])    # (D/2, TB)
        t = st[D_HALF:, :]                      # (D/2, TB)

        # affine coupling on the second half + log-det accumulation
        y2 = x2 * jnp.exp(s) + t
        log_det = log_det + jnp.sum(s, axis=0, keepdims=True)   # XLU sublane reduce

        # fixed half-flip permutation: new x = [y2, x1]
        x1, x2 = y2, x1

    # Two unmasked full-lane stores (no concatenate), then the jac store.
    zT_ref[:D_HALF, :] = x1.astype(zT_ref.dtype)
    zT_ref[D_HALF:, :] = x2.astype(zT_ref.dtype)
    jac_ref[...] = log_det


def sequence_inn_forward(x, w1, b1, w2, b2):
    # One-time XLA layout plumbing: batch -> lanes, weights transposed so every
    # in-kernel matmul is (rows, k) @ (k, TB).
    xT = x.T                                    # (D, B)
    w1T = jnp.transpose(w1, (0, 2, 1))          # (N, H, D/2)
    b1T = jnp.transpose(b1, (0, 2, 1))          # (N, H, 1)
    w2T = jnp.transpose(w2, (0, 2, 1))          # (N, D, H)
    b2T = jnp.transpose(b2, (0, 2, 1))          # (N, D, 1)

    grid = (B // TB,)
    zT, jacT = pl.pallas_call(
        seq_inn_kernel,
        out_shape=(
            jax.ShapeDtypeStruct((D, B), jnp.float32),
            jax.ShapeDtypeStruct((1, B), jnp.float32),
        ),
        grid=grid,
        in_specs=[
            pl.BlockSpec((D, TB), lambda i: (0, i)),
            # Weights: constant index_map -> VMEM-resident across batch tiles.
            pl.BlockSpec((N_BLOCKS, H, D_HALF), lambda i: (0, 0, 0)),
            pl.BlockSpec((N_BLOCKS, H, 1), lambda i: (0, 0, 0)),
            pl.BlockSpec((N_BLOCKS, D, H), lambda i: (0, 0, 0)),
            pl.BlockSpec((N_BLOCKS, D, 1), lambda i: (0, 0, 0)),
        ],
        out_specs=(
            pl.BlockSpec((D, TB), lambda i: (0, i)),
            pl.BlockSpec((1, TB), lambda i: (0, i)),
        ),
        compiler_params=pltpu.CompilerParams(
            # Batch tiles are independent (relevant only if TB < B on v7x).
            dimension_semantics=("parallel",)
        ),
    )(xT, w1T, b1T, w2T, b2T)
    return zT.T, jacT[0]  # log_det_jac has shape (batch,), like the torch module


# ---------------- pure-JAX reference (same math) ----------------
def sequence_inn_ref(x, w1, b1, w2, b2):
    x = x.astype(jnp.float32)
    log_det = jnp.zeros((x.shape[0],), jnp.float32)
    for k in range(N_BLOCKS):
        x1, x2 = x[:, :D_HALF], x[:, D_HALF:]
        h = jnp.maximum(x1 @ w1[k] + b1[k, 0], 0.0)
        st = h @ w2[k] + b2[k, 0]
        s = CLAMP * jnp.tanh(st[:, :D_HALF])
        t = st[:, D_HALF:]
        y2 = x2 * jnp.exp(s) + t
        log_det = log_det + jnp.sum(s, axis=-1)
        x = jnp.concatenate([y2, x1], axis=-1)
    return x, log_det


if __name__ == "__main__":
    key = jax.random.PRNGKey(0)
    kx, kw1, kb1, kw2, kb2 = jax.random.split(key, 5)

    x = jax.random.normal(kx, (B, D), jnp.float32)
    # deterministic synthetic block parameters (SequenceINN has none of its own)
    w1 = 0.1 * jax.random.normal(kw1, (N_BLOCKS, D_HALF, H), jnp.float32)
    b1 = 0.1 * jax.random.normal(kb1, (N_BLOCKS, 1, H), jnp.float32)
    w2 = 0.1 * jax.random.normal(kw2, (N_BLOCKS, H, D), jnp.float32)
    b2 = 0.1 * jax.random.normal(kb2, (N_BLOCKS, 1, D), jnp.float32)

    z, jac = jax.block_until_ready(sequence_inn_forward(x, w1, b1, w2, b2))
    z_ref, jac_ref = sequence_inn_ref(x, w1, b1, w2, b2)

    np.testing.assert_allclose(np.asarray(z), np.asarray(z_ref), rtol=1e-5, atol=1e-5)
    np.testing.assert_allclose(np.asarray(jac), np.asarray(jac_ref), rtol=1e-5, atol=1e-5)

    # TODO(synk): SequenceINN's runtime container features (append(), slicing,
    # conditioning inputs, rev=True inverse pass) are Python-level graph
    # plumbing with no kernel equivalent; only the forward hot path is fused.
    print("KERNEL_OK")
</pallas_src>

<mosaic_0001>
module attributes {stable_mosaic.version = 11 : i64} {
  func.func @seq_inn_kernel(%arg0: i32, %arg1: memref<32x256xf32, #tpu.memory_space<vmem>>, %arg2: memref<4x32x16xf32, #tpu.memory_space<vmem>>, %arg3: memref<4x32x1xf32, #tpu.memory_space<vmem>>, %arg4: memref<4x32x32xf32, #tpu.memory_space<vmem>>, %arg5: memref<4x32x1xf32, #tpu.memory_space<vmem>>, %arg6: memref<32x256xf32, #tpu.memory_space<vmem>>, %arg7: memref<1x256xf32, #tpu.memory_space<vmem>>) attributes {dimension_semantics = [#tpu.dimension_semantics<parallel>], iteration_bounds = array<i64: 1>, scalar_prefetch = 0 : i64, scratch_operands = 0 : i64, tpu.core_type = #tpu.core_type<tc>, window_params = [{transform_indices = @transform_0, window_bounds = array<i64: 32, 256>}, {pipeline_mode = #tpu.pipeline_mode<synchronous>, transform_indices = @transform_1, window_bounds = array<i64: 4, 32, 16>}, {pipeline_mode = #tpu.pipeline_mode<synchronous>, transform_indices = @transform_2, window_bounds = array<i64: 4, 32, 1>}, {pipeline_mode = #tpu.pipeline_mode<synchronous>, transform_indices = @transform_3, window_bounds = array<i64: 4, 32, 32>}, {pipeline_mode = #tpu.pipeline_mode<synchronous>, transform_indices = @transform_4, window_bounds = array<i64: 4, 32, 1>}, {transform_indices = @transform_5, window_bounds = array<i64: 32, 256>}, {transform_indices = @transform_6, window_bounds = array<i64: 1, 256>}]} {
    %c0 = arith.constant 0 : index
    %c0_0 = arith.constant 0 : index
    %0 = vector.load %arg1[%c0, %c0_0] : memref<32x256xf32, #tpu.memory_space<vmem>>, vector<16x256xf32>
    %c16 = arith.constant 16 : index
    %c0_1 = arith.constant 0 : index
    %1 = vector.load %arg1[%c16, %c0_1] : memref<32x256xf32, #tpu.memory_space<vmem>>, vector<16x256xf32>
    %cst = arith.constant 0.000000e+00 : f32
    %2 = vector.broadcast %cst : f32 to vector<1x256xf32>
    %c0_2 = arith.constant 0 : index
    %c0_3 = arith.constant 0 : index
    %c0_4 = arith.constant 0 : index
    %3 = vector.load %arg2[%c0_2, %c0_3, %c0_4] : memref<4x32x16xf32, #tpu.memory_space<vmem>>, vector<1x32x16xf32>
    %4 = vector.shape_cast %3 : vector<1x32x16xf32> to vector<32x16xf32>
    %c0_5 = arith.constant 0 : index
    %c0_6 = arith.constant 0 : index
    %c0_7 = arith.constant 0 : index
    %5 = vector.load %arg3[%c0_5, %c0_6, %c0_7] : memref<4x32x1xf32, #tpu.memory_space<vmem>>, vector<1x32x1xf32>
    %6 = vector.shape_cast %5 : vector<1x32x1xf32> to vector<32x1xf32>
    %c0_8 = arith.constant 0 : index
    %c0_9 = arith.constant 0 : index
    %c0_10 = arith.constant 0 : index
    %7 = vector.load %arg4[%c0_8, %c0_9, %c0_10] : memref<4x32x32xf32, #tpu.memory_space<vmem>>, vector<1x32x32xf32>
    %8 = vector.shape_cast %7 : vector<1x32x32xf32> to vector<32x32xf32>
    %c0_11 = arith.constant 0 : index
    %c0_12 = arith.constant 0 : index
    %c0_13 = arith.constant 0 : index
    %9 = vector.load %arg5[%c0_11, %c0_12, %c0_13] : memref<4x32x1xf32, #tpu.memory_space<vmem>>, vector<1x32x1xf32>
    %10 = vector.shape_cast %9 : vector<1x32x1xf32> to vector<32x1xf32>
    %cst_14 = arith.constant dense<0.000000e+00> : vector<32x256xf32>
    %11 = tpu.matmul %4, %0, %cst_14 {dimension_numbers = #tpu.dot_dimension_numbers<[1], [0], [0], [1], [0, 0, 1, 1], [], []>} : vector<32x16xf32>, vector<16x256xf32>, vector<32x256xf32> -> vector<32x256xf32>
    %12 = vector.broadcast %6 : vector<32x1xf32> to vector<32x256xf32>
    %13 = arith.addf %11, %12 : vector<32x256xf32>
    %cst_15 = arith.constant 0.000000e+00 : f32
    %14 = vector.broadcast %cst_15 : f32 to vector<32x256xf32>
    %15 = arith.maximumf %13, %14 : vector<32x256xf32>
    %cst_16 = arith.constant dense<0.000000e+00> : vector<32x256xf32>
    %16 = tpu.matmul %8, %15, %cst_16 {dimension_numbers = #tpu.dot_dimension_numbers<[1], [0], [0], [1], [0, 0, 1, 1], [], []>} : vector<32x32xf32>, vector<32x256xf32>, vector<32x256xf32> -> vector<32x256xf32>
    %17 = vector.broadcast %10 : vector<32x1xf32> to vector<32x256xf32>
    %18 = arith.addf %16, %17 : vector<32x256xf32>
    %19 = vector.extract_strided_slice %18 {offsets = [0, 0], sizes = [16, 256], strides = [1, 1]} : vector<32x256xf32> to vector<16x256xf32>
    %20 = math.tanh %19 : vector<16x256xf32>
    %cst_17 = arith.constant 2.000000e+00 : f32
    %21 = vector.broadcast %cst_17 : f32 to vector<16x256xf32>
    %22 = arith.mulf %21, %20 : vector<16x256xf32>
    %23 = vector.extract_strided_slice %18 {offsets = [16, 0], sizes = [16, 256], strides = [1, 1]} : vector<32x256xf32> to vector<16x256xf32>
    %24 = math.exp %22 : vector<16x256xf32>
    %25 = arith.mulf %1, %24 : vector<16x256xf32>
    %26 = arith.addf %25, %23 : vector<16x256xf32>
    %cst_18 = arith.constant dense<0.000000e+00> : vector<256xf32>
    %27 = vector.multi_reduction <add>, %22, %cst_18 [0] : vector<16x256xf32> to vector<256xf32>
    %28 = vector.shape_cast %27 : vector<256xf32> to vector<1x256xf32>
    %29 = arith.addf %2, %28 : vector<1x256xf32>
    %c1 = arith.constant 1 : index
    %c0_19 = arith.constant 0 : index
    %c0_20 = arith.constant 0 : index
    %30 = vector.load %arg2[%c1, %c0_19, %c0_20] : memref<4x32x16xf32, #tpu.memory_space<vmem>>, vector<1x32x16xf32>
    %31 = vector.shape_cast %30 : vector<1x32x16xf32> to vector<32x16xf32>
    %c1_21 = arith.constant 1 : index
    %c0_22 = arith.constant 0 : index
    %c0_23 = arith.constant 0 : index
    %32 = vector.load %arg3[%c1_21, %c0_22, %c0_23] : memref<4x32x1xf32, #tpu.memory_space<vmem>>, vector<1x32x1xf32>
    %33 = vector.shape_cast %32 : vector<1x32x1xf32> to vector<32x1xf32>
    %c1_24 = arith.constant 1 : index
    %c0_25 = arith.constant 0 : index
    %c0_26 = arith.constant 0 : index
    %34 = vector.load %arg4[%c1_24, %c0_25, %c0_26] : memref<4x32x32xf32, #tpu.memory_space<vmem>>, vector<1x32x32xf32>
    %35 = vector.shape_cast %34 : vector<1x32x32xf32> to vector<32x32xf32>
    %c1_27 = arith.constant 1 : index
    %c0_28 = arith.constant 0 : index
    %c0_29 = arith.constant 0 : index
    %36 = vector.load %arg5[%c1_27, %c0_28, %c0_29] : memref<4x32x1xf32, #tpu.memory_space<vmem>>, vector<1x32x1xf32>
    %37 = vector.shape_cast %36 : vector<1x32x1xf32> to vector<32x1xf32>
    %cst_30 = arith.constant dense<0.000000e+00> : vector<32x256xf32>
    %38 = tpu.matmul %31, %26, %cst_30 {dimension_numbers = #tpu.dot_dimension_numbers<[1], [0], [0], [1], [0, 0, 1, 1], [], []>} : vector<32x16xf32>, vector<16x256xf32>, vector<32x256xf32> -> vector<32x256xf32>
    %39 = vector.broadcast %33 : vector<32x1xf32> to vector<32x256xf32>
    %40 = arith.addf %38, %39 : vector<32x256xf32>
    %cst_31 = arith.constant 0.000000e+00 : f32
    %41 = vector.broadcast %cst_31 : f32 to vector<32x256xf32>
    %42 = arith.maximumf %40, %41 : vector<32x256xf32>
    %cst_32 = arith.constant dense<0.000000e+00> : vector<32x256xf32>
    %43 = tpu.matmul %35, %42, %cst_32 {dimension_numbers = #tpu.dot_dimension_numbers<[1], [0], [0], [1], [0, 0, 1, 1], [], []>} : vector<32x32xf32>, vector<32x256xf32>, vector<32x256xf32> -> vector<32x256xf32>
    %44 = vector.broadcast %37 : vector<32x1xf32> to vector<32x256xf32>
    %45 = arith.addf %43, %44 : vector<32x256xf32>
    %46 = vector.extract_strided_slice %45 {offsets = [0, 0], sizes = [16, 256], strides = [1, 1]} : vector<32x256xf32> to vector<16x256xf32>
    %47 = math.tanh %46 : vector<16x256xf32>
    %cst_33 = arith.constant 2.000000e+00 : f32
    %48 = vector.broadcast %cst_33 : f32 to vector<16x256xf32>
    %49 = arith.mulf %48, %47 : vector<16x256xf32>
    %50 = vector.extract_strided_slice %45 {offsets = [16, 0], sizes = [16, 256], strides = [1, 1]} : vector<32x256xf32> to vector<16x256xf32>
    %51 = math.exp %49 : vector<16x256xf32>
    %52 = arith.mulf %0, %51 : vector<16x256xf32>
    %53 = arith.addf %52, %50 : vector<16x256xf32>
    %cst_34 = arith.constant dense<0.000000e+00> : vector<256xf32>
    %54 = vector.multi_reduction <add>, %49, %cst_34 [0] : vector<16x256xf32> to vector<256xf32>
    %55 = vector.shape_cast %54 : vector<256xf32> to vector<1x256xf32>
    %56 = arith.addf %29, %55 : vector<1x256xf32>
    %c2 = arith.constant 2 : index
    %c0_35 = arith.constant 0 : index
    %c0_36 = arith.constant 0 : index
    %57 = vector.load %arg2[%c2, %c0_35, %c0_36] : memref<4x32x16xf32, #tpu.memory_space<vmem>>, vector<1x32x16xf32>
    %58 = vector.shape_cast %57 : vector<1x32x16xf32> to vector<32x16xf32>
    %c2_37 = arith.constant 2 : index
    %c0_38 = arith.constant 0 : index
    %c0_39 = arith.constant 0 : index
    %59 = vector.load %arg3[%c2_37, %c0_38, %c0_39] : memref<4x32x1xf32, #tpu.memory_space<vmem>>, vector<1x32x1xf32>
    %60 = vector.shape_cast %59 : vector<1x32x1xf32> to vector<32x1xf32>
    %c2_40 = arith.constant 2 : index
    %c0_41 = arith.constant 0 : index
    %c0_42 = arith.constant 0 : index
    %61 = vector.load %arg4[%c2_40, %c0_41, %c0_42] : memref<4x32x32xf32, #tpu.memory_space<vmem>>, vector<1x32x32xf32>
    %62 = vector.shape_cast %61 : vector<1x32x32xf32> to vector<32x32xf32>
    %c2_43 = arith.constant 2 : index
    %c0_44 = arith.constant 0 : index
    %c0_45 = arith.constant 0 : index
    %63 = vector.load %arg5[%c2_43, %c0_44, %c0_45] : memref<4x32x1xf32, #tpu.memory_space<vmem>>, vector<1x32x1xf32>
    %64 = vector.shape_cast %63 : vector<1x32x1xf32> to vector<32x1xf32>
    %cst_46 = arith.constant dense<0.000000e+00> : vector<32x256xf32>
    %65 = tpu.matmul %58, %53, %cst_46 {dimension_numbers = #tpu.dot_dimension_numbers<[1], [0], [0], [1], [0, 0, 1, 1], [], []>} : vector<32x16xf32>, vector<16x256xf32>, vector<32x256xf32> -> vector<32x256xf32>
    %66 = vector.broadcast %60 : vector<32x1xf32> to vector<32x256xf32>
    %67 = arith.addf %65, %66 : vector<32x256xf32>
    %cst_47 = arith.constant 0.000000e+00 : f32
    %68 = vector.broadcast %cst_47 : f32 to vector<32x256xf32>
    %69 = arith.maximumf %67, %68 : vector<32x256xf32>
    %cst_48 = arith.constant dense<0.000000e+00> : vector<32x256xf32>
    %70 = tpu.matmul %62, %69, %cst_48 {dimension_numbers = #tpu.dot_dimension_numbers<[1], [0], [0], [1], [0, 0, 1, 1], [], []>} : vector<32x32xf32>, vector<32x256xf32>, vector<32x256xf32> -> vector<32x256xf32>
    %71 = vector.broadcast %64 : vector<32x1xf32> to vector<32x256xf32>
    %72 = arith.addf %70, %71 : vector<32x256xf32>
    %73 = vector.extract_strided_slice %72 {offsets = [0, 0], sizes = [16, 256], strides = [1, 1]} : vector<32x256xf32> to vector<16x256xf32>
    %74 = math.tanh %73 : vector<16x256xf32>
    %cst_49 = arith.constant 2.000000e+00 : f32
    %75 = vector.broadcast %cst_49 : f32 to vector<16x256xf32>
    %76 = arith.mulf %75, %74 : vector<16x256xf32>
    %77 = vector.extract_strided_slice %72 {offsets = [16, 0], sizes = [16, 256], strides = [1, 1]} : vector<32x256xf32> to vector<16x256xf32>
    %78 = math.exp %76 : vector<16x256xf32>
    %79 = arith.mulf %26, %78 : vector<16x256xf32>
    %80 = arith.addf %79, %77 : vector<16x256xf32>
    %cst_50 = arith.constant dense<0.000000e+00> : vector<256xf32>
    %81 = vector.multi_reduction <add>, %76, %cst_50 [0] : vector<16x256xf32> to vector<256xf32>
    %82 = vector.shape_cast %81 : vector<256xf32> to vector<1x256xf32>
    %83 = arith.addf %56, %82 : vector<1x256xf32>
    %c3 = arith.constant 3 : index
    %c0_51 = arith.constant 0 : index
    %c0_52 = arith.constant 0 : index
    %84 = vector.load %arg2[%c3, %c0_51, %c0_52] : memref<4x32x16xf32, #tpu.memory_space<vmem>>, vector<1x32x16xf32>
    %85 = vector.shape_cast %84 : vector<1x32x16xf32> to vector<32x16xf32>
    %c3_53 = arith.constant 3 : index
    %c0_54 = arith.constant 0 : index
    %c0_55 = arith.constant 0 : index
    %86 = vector.load %arg3[%c3_53, %c0_54, %c0_55] : memref<4x32x1xf32, #tpu.memory_space<vmem>>, vector<1x32x1xf32>
    %87 = vector.shape_cast %86 : vector<1x32x1xf32> to vector<32x1xf32>
    %c3_56 = arith.constant 3 : index
    %c0_57 = arith.constant 0 : index
    %c0_58 = arith.constant 0 : index
    %88 = vector.load %arg4[%c3_56, %c0_57, %c0_58] : memref<4x32x32xf32, #tpu.memory_space<vmem>>, vector<1x32x32xf32>
    %89 = vector.shape_cast %88 : vector<1x32x32xf32> to vector<32x32xf32>
    %c3_59 = arith.constant 3 : index
    %c0_60 = arith.constant 0 : index
    %c0_61 = arith.constant 0 : index
    %90 = vector.load %arg5[%c3_59, %c0_60, %c0_61] : memref<4x32x1xf32, #tpu.memory_space<vmem>>, vector<1x32x1xf32>
    %91 = vector.shape_cast %90 : vector<1x32x1xf32> to vector<32x1xf32>
    %cst_62 = arith.constant dense<0.000000e+00> : vector<32x256xf32>
    %92 = tpu.matmul %85, %80, %cst_62 {dimension_numbers = #tpu.dot_dimension_numbers<[1], [0], [0], [1], [0, 0, 1, 1], [], []>} : vector<32x16xf32>, vector<16x256xf32>, vector<32x256xf32> -> vector<32x256xf32>
    %93 = vector.broadcast %87 : vector<32x1xf32> to vector<32x256xf32>
    %94 = arith.addf %92, %93 : vector<32x256xf32>
    %cst_63 = arith.constant 0.000000e+00 : f32
    %95 = vector.broadcast %cst_63 : f32 to vector<32x256xf32>
    %96 = arith.maximumf %94, %95 : vector<32x256xf32>
    %cst_64 = arith.constant dense<0.000000e+00> : vector<32x256xf32>
    %97 = tpu.matmul %89, %96, %cst_64 {dimension_numbers = #tpu.dot_dimension_numbers<[1], [0], [0], [1], [0, 0, 1, 1], [], []>} : vector<32x32xf32>, vector<32x256xf32>, vector<32x256xf32> -> vector<32x256xf32>
    %98 = vector.broadcast %91 : vector<32x1xf32> to vector<32x256xf32>
    %99 = arith.addf %97, %98 : vector<32x256xf32>
    %100 = vector.extract_strided_slice %99 {offsets = [0, 0], sizes = [16, 256], strides = [1, 1]} : vector<32x256xf32> to vector<16x256xf32>
    %101 = math.tanh %100 : vector<16x256xf32>
    %cst_65 = arith.constant 2.000000e+00 : f32
    %102 = vector.broadcast %cst_65 : f32 to vector<16x256xf32>
    %103 = arith.mulf %102, %101 : vector<16x256xf32>
    %104 = vector.extract_strided_slice %99 {offsets = [16, 0], sizes = [16, 256], strides = [1, 1]} : vector<32x256xf32> to vector<16x256xf32>
    %105 = math.exp %103 : vector<16x256xf32>
    %106 = arith.mulf %53, %105 : vector<16x256xf32>
    %107 = arith.addf %106, %104 : vector<16x256xf32>
    %cst_66 = arith.constant dense<0.000000e+00> : vector<256xf32>
    %108 = vector.multi_reduction <add>, %103, %cst_66 [0] : vector<16x256xf32> to vector<256xf32>
    %109 = vector.shape_cast %108 : vector<256xf32> to vector<1x256xf32>
    %110 = arith.addf %83, %109 : vector<1x256xf32>
    %c0_67 = arith.constant 0 : index
    %c0_68 = arith.constant 0 : index
    %111 = vector.load %arg6[%c0_67, %c0_68] : memref<32x256xf32, #tpu.memory_space<vmem>>, vector<16x256xf32>
    tpu.vector_store %arg6[%c0_67, %c0_68], %107 {strides = array<i32>} : memref<32x256xf32, #tpu.memory_space<vmem>>, vector<16x256xf32>,
    %c16_69 = arith.constant 16 : index
    %c0_70 = arith.constant 0 : index
    %112 = vector.load %arg6[%c16_69, %c0_70] : memref<32x256xf32, #tpu.memory_space<vmem>>, vector<16x256xf32>
    tpu.vector_store %arg6[%c16_69, %c0_70], %80 {strides = array<i32>} : memref<32x256xf32, #tpu.memory_space<vmem>>, vector<16x256xf32>,
    %c0_71 = arith.constant 0 : index
    %c0_72 = arith.constant 0 : index
    %113 = vector.load %arg7[%c0_71, %c0_72] : memref<1x256xf32, #tpu.memory_space<vmem>>, vector<1x256xf32>
    tpu.vector_store %arg7[%c0_71, %c0_72], %110 {strides = array<i32>} : memref<1x256xf32, #tpu.memory_space<vmem>>, vector<1x256xf32>,
    return
  }
  func.func @transform_0(%arg0: i32) -> (i32, i32) {
    %c0_i32 = arith.constant 0 : i32
    %c0_i32_0 = arith.constant 0 : i32
    return %c0_i32, %arg0 : i32, i32
  }
  func.func @transform_1(%arg0: i32) -> (i32, i32, i32) {
    %c0_i32 = arith.constant 0 : i32
    %c0_i32_0 = arith.constant 0 : i32
    %c0_i32_1 = arith.constant 0 : i32
    %c0_i32_2 = arith.constant 0 : i32
    return %c0_i32, %c0_i32_0, %c0_i32_1 : i32, i32, i32
  }
  func.func @transform_2(%arg0: i32) -> (i32, i32, i32) {
    %c0_i32 = arith.constant 0 : i32
    %c0_i32_0 = arith.constant 0 : i32
    %c0_i32_1 = arith.constant 0 : i32
    %c0_i32_2 = arith.constant 0 : i32
    return %c0_i32, %c0_i32_0, %c0_i32_1 : i32, i32, i32
  }
  func.func @transform_3(%arg0: i32) -> (i32, i32, i32) {
    %c0_i32 = arith.constant 0 : i32
    %c0_i32_0 = arith.constant 0 : i32
    %c0_i32_1 = arith.constant 0 : i32
    %c0_i32_2 = arith.constant 0 : i32
    return %c0_i32, %c0_i32_0, %c0_i32_1 : i32, i32, i32
  }
  func.func @transform_4(%arg0: i32) -> (i32, i32, i32) {
    %c0_i32 = arith.constant 0 : i32
    %c0_i32_0 = arith.constant 0 : i32
    %c0_i32_1 = arith.constant 0 : i32
    %c0_i32_2 = arith.constant 0 : i32
    return %c0_i32, %c0_i32_0, %c0_i32_1 : i32, i32, i32
  }
  func.func @transform_5(%arg0: i32) -> (i32, i32) {
    %c0_i32 = arith.constant 0 : i32
    %c0_i32_0 = arith.constant 0 : i32
    return %c0_i32, %arg0 : i32, i32
  }
  func.func @transform_6(%arg0: i32) -> (i32, i32) {
    %c0_i32 = arith.constant 0 : i32
    %c0_i32_0 = arith.constant 0 : i32
    return %c0_i32, %arg0 : i32, i32
  }
}

</mosaic_0001>

<llo_original>
// kernel: tpu_custom_call.1
$region0: #{tpu_custom_call.1}
  #allocation0 [shape = 'u32[]', space=smem, size = 0x4, offset = 0x4, fixed_abs, tag = 'smem constant byte address 0x4 - core index']
  #allocation1 [shape = 'u32[144,128]{1,0:T(1,128)}', space=vmem, size = 0x12000, scoped, tag = 'internal scratch']
  %s0 = inlined_call_operand.vmem [shape: f32[32,256], index: 0, kind: input, shape index: {}]
  %s1 = inlined_call_operand.vmem [shape: f32[4,32,16], index: 1, kind: input, shape index: {}]
  %s2 = inlined_call_operand.vmem [shape: f32[4,32,1], index: 2, kind: input, shape index: {}]
  %s3 = inlined_call_operand.vmem [shape: f32[4,32,32], index: 3, kind: input, shape index: {}]
  %s4 = inlined_call_operand.vmem [shape: f32[4,32,1], index: 4, kind: input, shape index: {}]
  %s5 = inlined_call_operand.hbm [shape: f32[32,256], index: 5, kind: output, shape index: {0}]
  %s6 = inlined_call_operand.hbm [shape: f32[1,256], index: 6, kind: output, shape index: {1}]
  %7 = xla_tuple %s5, %s6
  %s8 = sld [smem:[#allocation0]]
  $region38: #{tpu_custom_call.1} parent=0
    _
  %s10 = ssub.s32 1, %s8
  %s11 = scalar_select 0, %s10, %s8
  $region1: #{tpu_custom_call.1} parent=0
    #allocation2 [shape = 'u8[32768]{0}', space=vmem, size = 0x8000, scoped, tag = 'output window, operand 0, single buffered']
    #allocation3 [shape = 's32[1]{0}', space=sflag, size = 0x4, scoped, tag = 'scoped memory for tpu_custom_call.1']
    #allocation4 [shape = 'u8[1024]{0}', space=vmem, size = 0x400, scoped, tag = 'output window, operand 1, single buffered']
    #allocation5 [shape = 's32[1]{0}', space=sflag, size = 0x4, scoped, tag = 'scoped memory for tpu_custom_call.1']
    %12 = vsyncpa [#allocation3], 0
    %13 = vsyncpa [#allocation5], 0
    // Predicated region
    $region2: #{tpu_custom_call.1} parent=1 // pred_check
      _
    $region3: #{tpu_custom_call.1} parent=1 // pred_check_branch
      %15 = sbr.rel (0) target = $region5
    $region4: #{tpu_custom_call.1} parent=1 // pred_region
      _
    $region5: #{tpu_custom_call.1} parent=1 // pred_fallthru
      _
    // Predicated region
    $region6: #{tpu_custom_call.1} parent=1 // pred_check
      _
    $region7: #{tpu_custom_call.1} parent=1 // pred_check_branch
      %17 = sbr.rel (0) target = $region9
    $region8: #{tpu_custom_call.1} parent=1 // pred_region
      _
    $region9: #{tpu_custom_call.1} parent=1 // pred_fallthru
      _
    // Predicated region
    $region10: #{tpu_custom_call.1} parent=1 // pred_check
      _
    $region11: #{tpu_custom_call.1} parent=1 // pred_check_branch
      %19 = sbr.rel (0) target = $region13
    $region12: #{tpu_custom_call.1} parent=1 // pred_region
      _
    $region13: #{tpu_custom_call.1} parent=1 // pred_fallthru
      _
    // Predicated region
    $region14: #{tpu_custom_call.1} parent=1 // pred_check
      _
    $region15: #{tpu_custom_call.1} parent=1 // pred_check_branch
      %21 = sbr.rel (0) target = $region17
    $region16: #{tpu_custom_call.1} parent=1 // pred_region
      _
    $region17: #{tpu_custom_call.1} parent=1 // pred_fallthru
      _
    // Predicated region
    $region18: #{tpu_custom_call.1} parent=1 // pred_check
      _
    $region19: #{tpu_custom_call.1} parent=1 // pred_check_branch
      %23 = sbr.rel (0) target = $region21
    $region20: #{tpu_custom_call.1} parent=1 // pred_region
      _
    $region21: #{tpu_custom_call.1} parent=1 // pred_fallthru
      _
    %v24 = vld [vmem:[%s0] sm:$0xff]
    %v25 = vld [vmem:[%s0 + $0x8] sm:$0xff]
    %v26 = vld [vmem:[%s0 + $0x10] sm:$0xff]
    %v27 = vld [vmem:[%s0 + $0x18] sm:$0xff]
    %v28 = vld [vmem:[%s0 + $0x20] sm:$0xff]
    %v29 = vld [vmem:[%s0 + $0x28] sm:$0xff]
    %v30 = vld [vmem:[%s0 + $0x30] sm:$0xff]
    %v31 = vld [vmem:[%s0 + $0x38] sm:$0xff]
    %v32 = vld [vmem:[%s1] sm:$0xff]
    %v33 = vld [vmem:[%s1 + $0x8] sm:$0xff]
    %v34 = vld [vmem:[%s1 + $0x10] sm:$0xff]
    %v35 = vld [vmem:[%s1 + $0x18] sm:$0xff]
    %v36 = vld [vmem:[%s2] sm:$0xff]
    %v37 = vld [vmem:[%s2 + $0x8] sm:$0xff]
    %v38 = vld [vmem:[%s2 + $0x10] sm:$0xff]
    %v39 = vld [vmem:[%s2 + $0x18] sm:$0xff]
    %v40 = vld [vmem:[%s3] sm:$0xff]
    %v41 = vld [vmem:[%s3 + $0x8] sm:$0xff]
    %v42 = vld [vmem:[%s3 + $0x10] sm:$0xff]
    %v43 = vld [vmem:[%s3 + $0x18] sm:$0xff]
    %v44 = vld [vmem:[%s4] sm:$0xff]
    %v45 = vld [vmem:[%s4 + $0x8] sm:$0xff]
    %v46 = vld [vmem:[%s4 + $0x10] sm:$0xff]
    %v47 = vld [vmem:[%s4 + $0x18] sm:$0xff]
    %49 = vset.pattern.permute.xlu0 0
    %50 = vperm.xlu0 %49, %v36
    %v51 = vpop.permute.xlu0 %50
    %54 = vset.pattern.permute.xlu0 0
    %55 = vperm.xlu0 %54, %v37
    %v56 = vpop.permute.xlu0 %55
    %59 = vset.pattern.permute.xlu0 0
    %60 = vperm.xlu0 %59, %v38
    %v61 = vpop.permute.xlu0 %60
    %64 = vset.pattern.permute.xlu0 0
    %65 = vperm.xlu0 %64, %v39
    %v66 = vpop.permute.xlu0 %65
    %vm68 = vcmask 130048
    %v70 = vsel %vm68, %v32, 0
    %v73 = vsel %vm68, %v33, 0
    %v76 = vsel %vm68, %v34, 0
    %v79 = vsel %vm68, %v35, 0
    %81 = vmatprep.subr.mxu0 %v25
    %82 = vmatpush1.msra.mxu0 %v24
    %83 = vmatprep.subr.mxu0 %v27
    %84 = vmatpush1.msra.mxu0 %v26
    %85 = vmatprep.subr.mxu0 0.0
    %86 = vmatpush1.msra.mxu0 0.0
    %87 = vmatprep.subr.mxu0 0.0
    %88 = vmatpush1.msra.mxu0 0.0
    %89 = vmatprep.subr.mxu0 0.0
    %90 = vmatpush1.msra.mxu0 0.0
    %91 = vmatprep.subr.mxu0 0.0
    %92 = vmatpush1.msra.mxu0 0.0
    %93 = vmatprep.subr.mxu0 0.0
    %94 = vmatpush1.msra.mxu0 0.0
    %95 = vmatprep.subr.mxu0 0.0
    %96 = vmatpush1.msra.mxu0 0.0
    %97 = vmatprep.subr.mxu0 0.0
    %98 = vmatpush1.msra.mxu0 0.0
    %99 = vmatprep.subr.mxu0 0.0
    %100 = vmatpush1.msra.mxu0 0.0
    %101 = vmatprep.subr.mxu0 0.0
    %102 = vmatpush1.msra.mxu0 0.0
    %103 = vmatprep.subr.mxu0 0.0
    %104 = vmatpush1.msra.mxu0 0.0
    %105 = vmatprep.subr.mxu0 0.0
    %106 = vmatpush1.msra.mxu0 0.0
    %107 = vmatprep.subr.mxu0 0.0
    %108 = vmatpush1.msra.mxu0 0.0
    %109 = vmatprep.subr.mxu0 0.0
    %110 = vmatpush1.msra.mxu0 0.0
    %111 = vmatprep.subr.mxu0 0.0
    %112 = vmatpush1.msra.mxu0 0.0
    %113 = vmatprep.subr.mxu0 0.0
    %114 = vmatpush1.msra.mxu0 0.0
    %115 = vmatprep.subr.mxu0 0.0
    %116 = vmatpush1.msra.mxu0 0.0
    %117 = vmatprep.subr.mxu0 0.0
    %118 = vmatpush1.msra.mxu0 0.0
    %119 = vmatprep.subr.mxu0 0.0
    %120 = vmatpush1.msra.mxu0 0.0
    %121 = vmatprep.subr.mxu0 0.0
    %122 = vmatpush1.msra.mxu0 0.0
    %123 = vmatprep.subr.mxu0 0.0
    %124 = vmatpush1.msra.mxu0 0.0
    %125 = vmatprep.subr.mxu0 0.0
    %126 = vmatpush1.msra.mxu0 0.0
    %127 = vmatprep.subr.mxu0 0.0
    %128 = vmatpush1.msra.mxu0 0.0
    %129 = vmatprep.subr.mxu0 0.0
    %130 = vmatpush1.msra.mxu0 0.0
    %131 = vmatprep.subr.mxu0 0.0
    %132 = vmatpush1.msra.mxu0 0.0
    %133 = vmatprep.subr.mxu0 0.0
    %134 = vmatpush1.msra.mxu0 0.0
    %135 = vmatprep.subr.mxu0 0.0
    %136 = vmatpush1.msra.mxu0 0.0
    %137 = vmatprep.subr.mxu0 0.0
    %138 = vmatpush1.msra.mxu0 0.0
    %139 = vmatprep.subr.mxu0 0.0
    %140 = vmatpush1.msra.mxu0 0.0
    %141 = vmatprep.subr.mxu0 0.0
    %142 = vmatpush1.msra.mxu0 0.0
    %143 = vmatprep.subr.mxu0 0.0
    %144 = vmatpush1.msra.mxu0 0.0
    %145 = vmatprep.mubr.f32.mxu0 0.0
    %146 = vmatmul.mubr.f32.gmra.mrb[0].mxu0 %v70
    %v147 = vpop.f32.mrb[0].mxu0
    %v148 = vadd.f32 %v51, %v147
    %v149 = vpop.f32.mrb[0].mxu0
    %v150 = vadd.f32 %v51, %v149
    %151 = vmatprep.mubr.f32.mxu0 0.0
    %152 = vmatmul.mubr.f32.gmra.mrb[0].mxu0 %v73
    %v153 = vpop.f32.mrb[0].mxu0
    %v154 = vadd.f32 %v56, %v153
    %v155 = vpop.f32.mrb[0].mxu0
    %v156 = vadd.f32 %v56, %v155
    %157 = vmatprep.mubr.f32.mxu0 0.0
    %158 = vmatmul.mubr.f32.gmra.mrb[0].mxu0 %v76
    %v159 = vpop.f32.mrb[0].mxu0
    %v160 = vadd.f32 %v61, %v159
    %v161 = vpop.f32.mrb[0].mxu0
    %v162 = vadd.f32 %v61, %v161
    %163 = vmatprep.mubr.f32.mxu0 0.0
    %164 = vmatmul.mubr.f32.gmra.mrb[0].mxu0 %v79
    %v165 = vpop.f32.mrb[0].mxu0
    %v166 = vadd.f32 %v66, %v165
    %v167 = vpop.f32.mrb[0].mxu0
    %v168 = vadd.f32 %v66, %v167
    %169 = vdwg.mxu0
    %v170 = vmax.f32 %v148, 0.0
    %v171 = vmax.f32 %v150, 0.0
    %v172 = vmax.f32 %v154, 0.0
    %v173 = vmax.f32 %v156, 0.0
    %v174 = vmax.f32 %v160, 0.0
    %v175 = vmax.f32 %v162, 0.0
    %v176 = vmax.f32 %v166, 0.0
    %v177 = vmax.f32 %v168, 0.0
    %179 = vset.pattern.permute.xlu0 0
    %180 = vperm.xlu0 %179, %v44
    %v181 = vpop.permute.xlu0 %180
    %184 = vset.pattern.permute.xlu0 0
    %185 = vperm.xlu0 %184, %v45
    %v186 = vpop.permute.xlu0 %185
    %189 = vset.pattern.permute.xlu0 0
    %190 = vperm.xlu0 %189, %v46
    %v191 = vpop.permute.xlu0 %190
    %194 = vset.pattern.permute.xlu0 0
    %195 = vperm.xlu0 %194, %v47
    %v196 = vpop.permute.xlu0 %195
    %vm198 = vcmask 261120
    %v200 = vsel %vm198, %v40, 0
    %v203 = vsel %vm198, %v41, 0
    %v206 = vsel %vm198, %v42, 0
    %v209 = vsel %vm198, %v43, 0
    %211 = vmatprep.subr.mxu0 %v171
    %212 = vmatpush1.msra.mxu0 %v170
    %213 = vmatprep.subr.mxu0 %v173
    %214 = vmatpush1.msra.mxu0 %v172
    %215 = vmatprep.subr.mxu0 %v175
    %216 = vmatpush1.msra.mxu0 %v174
    %217 = vmatprep.subr.mxu0 %v177
    %218 = vmatpush1.msra.mxu0 %v176
    %219 = vmatprep.subr.mxu0 0.0
    %220 = vmatpush1.msra.mxu0 0.0
    %221 = vmatprep.subr.mxu0 0.0
    %222 = vmatpush1.msra.mxu0 0.0
    %223 = vmatprep.subr.mxu0 0.0
    %224 = vmatpush1.msra.mxu0 0.0
    %225 = vmatprep.subr.mxu0 0.0
    %226 = vmatpush1.msra.mxu0 0.0
    %227 = vmatprep.subr.mxu0 0.0
    %228 = vmatpush1.msra.mxu0 0.0
    %229 = vmatprep.subr.mxu0 0.0
    %230 = vmatpush1.msra.mxu0 0.0
    %231 = vmatprep.subr.mxu0 0.0
    %232 = vmatpush1.msra.mxu0 0.0
    %233 = vmatprep.subr.mxu0 0.0
    %234 = vmatpush1.msra.mxu0 0.0
    %235 = vmatprep.subr.mxu0 0.0
    %236 = vmatpush1.msra.mxu0 0.0
    %237 = vmatprep.subr.mxu0 0.0
    %238 = vmatpush1.msra.mxu0 0.0
    %239 = vmatprep.subr.mxu0 0.0
    %240 = vmatpush1.msra.mxu0 0.0
    %241 = vmatprep.subr.mxu0 0.0
    %242 = vmatpush1.msra.mxu0 0.0
    %243 = vmatprep.subr.mxu0 0.0
    %244 = vmatpush1.msra.mxu0 0.0
    %245 = vmatprep.subr.mxu0 0.0
    %246 = vmatpush1.msra.mxu0 0.0
    %247 = vmatprep.subr.mxu0 0.0
    %248 = vmatpush1.msra.mxu0 0.0
    %249 = vmatprep.subr.mxu0 0.0
    %250 = vmatpush1.msra.mxu0 0.0
    %251 = vmatprep.subr.mxu0 0.0
    %252 = vmatpush1.msra.mxu0 0.0
    %253 = vmatprep.subr.mxu0 0.0
    %254 = vmatpush1.msra.mxu0 0.0
    %255 = vmatprep.subr.mxu0 0.0
    %256 = vmatpush1.msra.mxu0 0.0
    %257 = vmatprep.subr.mxu0 0.0
    %258 = vmatpush1.msra.mxu0 0.0
    %259 = vmatprep.subr.mxu0 0.0
    %260 = vmatpush1.msra.mxu0 0.0
    %261 = vmatprep.subr.mxu0 0.0
    %262 = vmatpush1.msra.mxu0 0.0
    %263 = vmatprep.subr.mxu0 0.0
    %264 = vmatpush1.msra.mxu0 0.0
    %265 = vmatprep.subr.mxu0 0.0
    %266 = vmatpush1.msra.mxu0 0.0
    %267 = vmatprep.subr.mxu0 0.0
    %268 = vmatpush1.msra.mxu0 0.0
    %269 = vmatprep.subr.mxu0 0.0
    %270 = vmatpush1.msra.mxu0 0.0
    %271 = vmatprep.subr.mxu0 0.0
    %272 = vmatpush1.msra.mxu0 0.0
    %273 = vmatprep.subr.mxu0 0.0
    %274 = vmatpush1.msra.mxu0 0.0
    %275 = vmatprep.mubr.f32.mxu0 0.0
    %276 = vmatmul.mubr.f32.gmra.mrb[0].mxu0 %v200
    %v277 = vpop.f32.mrb[0].mxu0
    %v278 = vadd.f32 %v181, %v277
    %v279 = vpop.f32.mrb[0].mxu0
    %v280 = vadd.f32 %v181, %v279
    %281 = vmatprep.mubr.f32.mxu0 0.0
    %282 = vmatmul.mubr.f32.gmra.mrb[0].mxu0 %v203
    %v283 = vpop.f32.mrb[0].mxu0
    %v284 = vadd.f32 %v186, %v283
    %v285 = vpop.f32.mrb[0].mxu0
    %v286 = vadd.f32 %v186, %v285
    %287 = vmatprep.mubr.f32.mxu0 0.0
    %288 = vmatmul.mubr.f32.gmra.mrb[0].mxu0 %v206
    %v289 = vpop.f32.mrb[0].mxu0
    %v290 = vadd.f32 %v191, %v289
    %v291 = vpop.f32.mrb[0].mxu0
    %v292 = vadd.f32 %v191, %v291
    %293 = vmatprep.mubr.f32.mxu0 0.0
    %294 = vmatmul.mubr.f32.gmra.mrb[0].mxu0 %v209
    %v295 = vpop.f32.mrb[0].mxu0
    %v296 = vadd.f32 %v196, %v295
    %v297 = vpop.f32.mrb[0].mxu0
    %v298 = vadd.f32 %v196, %v297
    %299 = vdwg.mxu0
    %v300 = vtanh.pop %v278
    %v301 = vtanh.pop %v280
    %v302 = vtanh.pop %v284
    %v303 = vtanh.pop %v286
    %v304 = vmul.f32 %v300, 2.0
    %v305 = vmul.f32 %v301, 2.0
    %v306 = vmul.f32 %v302, 2.0
    %v307 = vmul.f32 %v303, 2.0
    %v308 = vmul.f32 %v304, 1.442695
    %v309 = vpow.pop %v308
    %v310 = vmul.f32 %v305, 1.442695
    %v311 = vpow.pop %v310
    %v312 = vmul.f32 %v306, 1.442695
    %v313 = vpow.pop %v312
    %v314 = vmul.f32 %v307, 1.442695
    %v315 = vpow.pop %v314
    %v316 = vmul.f32 %v28, %v309
    %v317 = vmul.f32 %v29, %v311
    %v318 = vmul.f32 %v30, %v313
    %v319 = vmul.f32 %v31, %v315
    %v320 = vadd.f32 %v316, %v290
    %v321 = vadd.f32 %v317, %v292
    %v322 = vadd.f32 %v318, %v296
    %v323 = vadd.f32 %v319, %v298
    %v324 = vadd.f32 %v304, %v306
    %v325 = vrot.slane %v324, 4
    %v326 = vadd.f32 %v324, %v325
    %v327 = vrot.slane %v326, 2
    %v328 = vadd.f32 %v326, %v327
    %v329 = vrot.slane %v328, 1
    %v330 = vadd.f32 %v328, %v329
    %v331 = vadd.f32 %v305, %v307
    %v332 = vrot.slane %v331, 4
    %v333 = vadd.f32 %v331, %v332
    %v334 = vrot.slane %v333, 2
    %v335 = vadd.f32 %v333, %v334
    %v336 = vrot.slane %v335, 1
    %v337 = vadd.f32 %v335, %v336
    %v338 = vadd.f32 %v330, 0.0
    %v339 = vadd.f32 %v337, 0.0
    %s340 = scalar_lea.vmem %s1, 32
    %v341 = vld [vmem:[%s340] sm:$0xff]
    %v342 = vld [vmem:[%s340 + $0x8] sm:$0xff]
    %v343 = vld [vmem:[%s340 + $0x10] sm:$0xff]
    %v344 = vld [vmem:[%s340 + $0x18] sm:$0xff]
    %s345 = scalar_lea.vmem %s2, 32
    %v346 = vld [vmem:[%s345] sm:$0xff]
    %v347 = vld [vmem:[%s345 + $0x8] sm:$0xff]
    %v348 = vld [vmem:[%s345 + $0x10] sm:$0xff]
    %v349 = vld [vmem:[%s345 + $0x18] sm:$0xff]
    %s350 = scalar_lea.vmem %s3, 32
    %v351 = vld [vmem:[%s350] sm:$0xff]
    %v352 = vld [vmem:[%s350 + $0x8] sm:$0xff]
    %v353 = vld [vmem:[%s350 + $0x10] sm:$0xff]
    %v354 = vld [vmem:[%s350 + $0x18] sm:$0xff]
    %s355 = scalar_lea.vmem %s4, 32
    %v356 = vld [vmem:[%s355] sm:$0xff]
    %v357 = vld [vmem:[%s355 + $0x8] sm:$0xff]
    %v358 = vld [vmem:[%s355 + $0x10] sm:$0xff]
    %v359 = vld [vmem:[%s355 + $0x18] sm:$0xff]
    %361 = vset.pattern.permute.xlu0 0
    %362 = vperm.xlu0 %361, %v346
    %v363 = vpop.permute.xlu0 %362
    %366 = vset.pattern.permute.xlu0 0
    %367 = vperm.xlu0 %366, %v347
    %v368 = vpop.permute.xlu0 %367
    %371 = vset.pattern.permute.xlu0 0
    %372 = vperm.xlu0 %371, %v348
    %v373 = vpop.permute.xlu0 %372
    %376 = vset.pattern.permute.xlu0 0
    %377 = vperm.xlu0 %376, %v349
    %v378 = vpop.permute.xlu0 %377
    %v381 = vsel %vm68, %v341, 0
    %v384 = vsel %vm68, %v342, 0
    %v387 = vsel %vm68, %v343, 0
    %v390 = vsel %vm68, %v344, 0
    %392 = vmatprep.subr.mxu0 %v321
    %393 = vmatpush1.msra.mxu0 %v320
    %394 = vmatprep.subr.mxu0 %v323
    %395 = vmatpush1.msra.mxu0 %v322
    %396 = vmatprep.subr.mxu0 0.0
    %397 = vmatpush1.msra.mxu0 0.0
    %398 = vmatprep.subr.mxu0 0.0
    %399 = vmatpush1.msra.mxu0 0.0
    %400 = vmatprep.subr.mxu0 0.0
    %401 = vmatpush1.msra.mxu0 0.0
    %402 = vmatprep.subr.mxu0 0.0
    %403 = vmatpush1.msra.mxu0 0.0
    %404 = vmatprep.subr.mxu0 0.0
    %405 = vmatpush1.msra.mxu0 0.0
    %406 = vmatprep.subr.mxu0 0.0
    %407 = vmatpush1.msra.mxu0 0.0
    %408 = vmatprep.subr.mxu0 0.0
    %409 = vmatpush1.msra.mxu0 0.0
    %410 = vmatprep.subr.mxu0 0.0
    %411 = vmatpush1.msra.mxu0 0.0
    %412 = vmatprep.subr.mxu0 0.0
    %413 = vmatpush1.msra.mxu0 0.0
    %414 = vmatprep.subr.mxu0 0.0
    %415 = vmatpush1.msra.mxu0 0.0
    %416 = vmatprep.subr.mxu0 0.0
    %417 = vmatpush1.msra.mxu0 0.0
    %418 = vmatprep.subr.mxu0 0.0
    %419 = vmatpush1.msra.mxu0 0.0
    %420 = vmatprep.subr.mxu0 0.0
    %421 = vmatpush1.msra.mxu0 0.0
    %422 = vmatprep.subr.mxu0 0.0
    %423 = vmatpush1.msra.mxu0 0.0
    %424 = vmatprep.subr.mxu0 0.0
    %425 = vmatpush1.msra.mxu0 0.0
    %426 = vmatprep.subr.mxu0 0.0
    %427 = vmatpush1.msra.mxu0 0.0
    %428 = vmatprep.subr.mxu0 0.0
    %429 = vmatpush1.msra.mxu0 0.0
    %430 = vmatprep.subr.mxu0 0.0
    %431 = vmatpush1.msra.mxu0 0.0
    %432 = vmatprep.subr.mxu0 0.0
    %433 = vmatpush1.msra.mxu0 0.0
    %434 = vmatprep.subr.mxu0 0.0
    %435 = vmatpush1.msra.mxu0 0.0
    %436 = vmatprep.subr.mxu0 0.0
    %437 = vmatpush1.msra.mxu0 0.0
    %438 = vmatprep.subr.mxu0 0.0
    %439 = vmatpush1.msra.mxu0 0.0
    %440 = vmatprep.subr.mxu0 0.0
    %441 = vmatpush1.msra.mxu0 0.0
    %442 = vmatprep.subr.mxu0 0.0
    %443 = vmatpush1.msra.mxu0 0.0
    %444 = vmatprep.subr.mxu0 0.0
    %445 = vmatpush1.msra.mxu0 0.0
    %446 = vmatprep.subr.mxu0 0.0
    %447 = vmatpush1.msra.mxu0 0.0
    %448 = vmatprep.subr.mxu0 0.0
    %449 = vmatpush1.msra.mxu0 0.0
    %450 = vmatprep.subr.mxu0 0.0
    %451 = vmatpush1.msra.mxu0 0.0
    %452 = vmatprep.subr.mxu0 0.0
    %453 = vmatpush1.msra.mxu0 0.0
    %454 = vmatprep.subr.mxu0 0.0
    %455 = vmatpush1.msra.mxu0 0.0
    %456 = vmatprep.mubr.f32.mxu0 0.0
    %457 = vmatmul.mubr.f32.gmra.mrb[0].mxu0 %v381
    %v458 = vpop.f32.mrb[0].mxu0
    %v459 = vadd.f32 %v363, %v458
    %v460 = vpop.f32.mrb[0].mxu0
    %v461 = vadd.f32 %v363, %v460
    %462 = vmatprep.mubr.f32.mxu0 0.0
    %463 = vmatmul.mubr.f32.gmra.mrb[0].mxu0 %v384
    %v464 = vpop.f32.mrb[0].mxu0
    %v465 = vadd.f32 %v368, %v464
    %v466 = vpop.f32.mrb[0].mxu0
    %v467 = vadd.f32 %v368, %v466
    %468 = vmatprep.mubr.f32.mxu0 0.0
    %469 = vmatmul.mubr.f32.gmra.mrb[0].mxu0 %v387
    %v470 = vpop.f32.mrb[0].mxu0
    %v471 = vadd.f32 %v373, %v470
    %v472 = vpop.f32.mrb[0].mxu0
    %v473 = vadd.f32 %v373, %v472
    %474 = vmatprep.mubr.f32.mxu0 0.0
    %475 = vmatmul.mubr.f32.gmra.mrb[0].mxu0 %v390
    %v476 = vpop.f32.mrb[0].mxu0
    %v477 = vadd.f32 %v378, %v476
    %v478 = vpop.f32.mrb[0].mxu0
    %v479 = vadd.f32 %v378, %v478
    %480 = vdwg.mxu0
    %v481 = vmax.f32 %v459, 0.0
    %v482 = vmax.f32 %v461, 0.0
    %v483 = vmax.f32 %v465, 0.0
    %v484 = vmax.f32 %v467, 0.0
    %v485 = vmax.f32 %v471, 0.0
    %v486 = vmax.f32 %v473, 0.0
    %v487 = vmax.f32 %v477, 0.0
    %v488 = vmax.f32 %v479, 0.0
    %490 = vset.pattern.permute.xlu0 0
    %491 = vperm.xlu0 %490, %v356
    %v492 = vpop.permute.xlu0 %491
    %495 = vset.pattern.permute.xlu0 0
    %496 = vperm.xlu0 %495, %v357
    %v497 = vpop.permute.xlu0 %496
    %500 = vset.pattern.permute.xlu0 0
    %501 = vperm.xlu0 %500, %v358
    %v502 = vpop.permute.xlu0 %501
    %505 = vset.pattern.permute.xlu0 0
    %506 = vperm.xlu0 %505, %v359
    %v507 = vpop.permute.xlu0 %506
    %v510 = vsel %vm198, %v351, 0
    %v513 = vsel %vm198, %v352, 0
    %v516 = vsel %vm198, %v353, 0
    %v519 = vsel %vm198, %v354, 0
    %521 = vmatprep.subr.mxu0 %v482
    %522 = vmatpush1.msra.mxu0 %v481
    %523 = vmatprep.subr.mxu0 %v484
    %524 = vmatpush1.msra.mxu0 %v483
    %525 = vmatprep.subr.mxu0 %v486
    %526 = vmatpush1.msra.mxu0 %v485
    %527 = vmatprep.subr.mxu0 %v488
    %528 = vmatpush1.msra.mxu0 %v487
    %529 = vmatprep.subr.mxu0 0.0
    %530 = vmatpush1.msra.mxu0 0.0
    %531 = vmatprep.subr.mxu0 0.0
    %532 = vmatpush1.msra.mxu0 0.0
    %533 = vmatprep.subr.mxu0 0.0
    %534 = vmatpush1.msra.mxu0 0.0
    %535 = vmatprep.subr.mxu0 0.0
    %536 = vmatpush1.msra.mxu0 0.0
    %537 = vmatprep.subr.mxu0 0.0
    %538 = vmatpush1.msra.mxu0 0.0
    %539 = vmatprep.subr.mxu0 0.0
    %540 = vmatpush1.msra.mxu0 0.0
    %541 = vmatprep.subr.mxu0 0.0
    %542 = vmatpush1.msra.mxu0 0.0
    %543 = vmatprep.subr.mxu0 0.0
    %544 = vmatpush1.msra.mxu0 0.0
    %545 = vmatprep.subr.mxu0 0.0
    %546 = vmatpush1.msra.mxu0 0.0
    %547 = vmatprep.subr.mxu0 0.0
    %548 = vmatpush1.msra.mxu0 0.0
    %549 = vmatprep.subr.mxu0 0.0
    %550 = vmatpush1.msra.mxu0 0.0
    %551 = vmatprep.subr.mxu0 0.0
    %552 = vmatpush1.msra.mxu0 0.0
    %553 = vmatprep.subr.mxu0 0.0
    %554 = vmatpush1.msra.mxu0 0.0
    %555 = vmatprep.subr.mxu0 0.0
    %556 = vmatpush1.msra.mxu0 0.0
    %557 = vmatprep.subr.mxu0 0.0
    %558 = vmatpush1.msra.mxu0 0.0
    %559 = vmatprep.subr.mxu0 0.0
    %560 = vmatpush1.msra.mxu0 0.0
    %561 = vmatprep.subr.mxu0 0.0
    %562 = vmatpush1.msra.mxu0 0.0
    %563 = vmatprep.subr.mxu0 0.0
    %564 = vmatpush1.msra.mxu0 0.0
    %565 = vmatprep.subr.mxu0 0.0
    %566 = vmatpush1.msra.mxu0 0.0
    %567 = vmatprep.subr.mxu0 0.0
    %568 = vmatpush1.msra.mxu0 0.0
    %569 = vmatprep.subr.mxu0 0.0
    %570 = vmatpush1.msra.mxu0 0.0
    %571 = vmatprep.subr.mxu0 0.0
    %572 = vmatpush1.msra.mxu0 0.0
    %573 = vmatprep.subr.mxu0 0.0
    %574 = vmatpush1.msra.mxu0 0.0
    %575 = vmatprep.subr.mxu0 0.0
    %576 = vmatpush1.msra.mxu0 0.0
    %577 = vmatprep.subr.mxu0 0.0
    %578 = vmatpush1.msra.mxu0 0.0
    %579 = vmatprep.subr.mxu0 0.0
    %580 = vmatpush1.msra.mxu0 0.0
    %581 = vmatprep.subr.mxu0 0.0
    %582 = vmatpush1.msra.mxu0 0.0
    %583 = vmatprep.subr.mxu0 0.0
    %584 = vmatpush1.msra.mxu0 0.0
    %585 = vmatprep.mubr.f32.mxu0 0.0
    %586 = vmatmul.mubr.f32.gmra.mrb[0].mxu0 %v510
    %v587 = vpop.f32.mrb[0].mxu0
    %v588 = vadd.f32 %v492, %v587
    %v589 = vpop.f32.mrb[0].mxu0
    %v590 = vadd.f32 %v492, %v589
    %591 = vmatprep.mubr.f32.mxu0 0.0
    %592 = vmatmul.mubr.f32.gmra.mrb[0].mxu0 %v513
    %v593 = vpop.f32.mrb[0].mxu0
    %v594 = vadd.f32 %v497, %v593
    %v595 = vpop.f32.mrb[0].mxu0
    %v596 = vadd.f32 %v497, %v595
    %597 = vmatprep.mubr.f32.mxu0 0.0
    %598 = vmatmul.mubr.f32.gmra.mrb[0].mxu0 %v516
    %v599 = vpop.f32.mrb[0].mxu0
    %v600 = vadd.f32 %v502, %v599
    %v601 = vpop.f32.mrb[0].mxu0
    %v602 = vadd.f32 %v502, %v601
    %603 = vmatprep.mubr.f32.mxu0 0.0
    %604 = vmatmul.mubr.f32.gmra.mrb[0].mxu0 %v519
    %v605 = vpop.f32.mrb[0].mxu0
    %v606 = vadd.f32 %v507, %v605
    %v607 = vpop.f32.mrb[0].mxu0
    %v608 = vadd.f32 %v507, %v607
    %609 = vdwg.mxu0
    %v610 = vtanh.pop %v588
    %v611 = vtanh.pop %v590
    %v612 = vtanh.pop %v594
    %v613 = vtanh.pop %v596
    %v614 = vmul.f32 %v610, 2.0
    %v615 = vmul.f32 %v611, 2.0
    %v616 = vmul.f32 %v612, 2.0
    %v617 = vmul.f32 %v613, 2.0
    %v618 = vmul.f32 %v614, 1.442695
    %v619 = vpow.pop %v618
    %v620 = vmul.f32 %v615, 1.442695
    %v621 = vpow.pop %v620
    %v622 = vmul.f32 %v616, 1.442695
    %v623 = vpow.pop %v622
    %v624 = vmul.f32 %v617, 1.442695
    %v625 = vpow.pop %v624
    %v626 = vmul.f32 %v24, %v619
    %v627 = vmul.f32 %v25, %v621
    %v628 = vmul.f32 %v26, %v623
    %v629 = vmul.f32 %v27, %v625
    %v630 = vadd.f32 %v626, %v600
    %v631 = vadd.f32 %v627, %v602
    %v632 = vadd.f32 %v628, %v606
    %v633 = vadd.f32 %v629, %v608
    %v634 = vadd.f32 %v614, %v616
    %v635 = vrot.slane %v634, 4
    %v636 = vadd.f32 %v634, %v635
    %v637 = vrot.slane %v636, 2
    %v638 = vadd.f32 %v636, %v637
    %v639 = vrot.slane %v638, 1
    %v640 = vadd.f32 %v638, %v639
    %v641 = vadd.f32 %v615, %v617
    %v642 = vrot.slane %v641, 4
    %v643 = vadd.f32 %v641, %v642
    %v644 = vrot.slane %v643, 2
    %v645 = vadd.f32 %v643, %v644
    %v646 = vrot.slane %v645, 1
    %v647 = vadd.f32 %v645, %v646
    %v648 = vadd.f32 %v338, %v640
    %v649 = vadd.f32 %v339, %v647
    %s650 = scalar_lea.vmem %s1, 64
    %v651 = vld [vmem:[%s650] sm:$0xff]
    %v652 = vld [vmem:[%s650 + $0x8] sm:$0xff]
    %v653 = vld [vmem:[%s650 + $0x10] sm:$0xff]
    %v654 = vld [vmem:[%s650 + $0x18] sm:$0xff]
    %s655 = scalar_lea.vmem %s2, 64
    %v656 = vld [vmem:[%s655] sm:$0xff]
    %v657 = vld [vmem:[%s655 + $0x8] sm:$0xff]
    %v658 = vld [vmem:[%s655 + $0x10] sm:$0xff]
    %v659 = vld [vmem:[%s655 + $0x18] sm:$0xff]
    %s660 = scalar_lea.vmem %s3, 64
    %v661 = vld [vmem:[%s660] sm:$0xff]
    %v662 = vld [vmem:[%s660 + $0x8] sm:$0xff]
    %v663 = vld [vmem:[%s660 + $0x10] sm:$0xff]
    %v664 = vld [vmem:[%s660 + $0x18] sm:$0xff]
    %s665 = scalar_lea.vmem %s4, 64
    %v666 = vld [vmem:[%s665] sm:$0xff]
    %v667 = vld [vmem:[%s665 + $0x8] sm:$0xff]
    %v668 = vld [vmem:[%s665 + $0x10] sm:$0xff]
    %v669 = vld [vmem:[%s665 + $0x18] sm:$0xff]
    %671 = vset.pattern.permute.xlu0 0
    %672 = vperm.xlu0 %671, %v656
    %v673 = vpop.permute.xlu0 %672
    %676 = vset.pattern.permute.xlu0 0
    %677 = vperm.xlu0 %676, %v657
    %v678 = vpop.permute.xlu0 %677
    %681 = vset.pattern.permute.xlu0 0
    %682 = vperm.xlu0 %681, %v658
    %v683 = vpop.permute.xlu0 %682
    %686 = vset.pattern.permute.xlu0 0
    %687 = vperm.xlu0 %686, %v659
    %v688 = vpop.permute.xlu0 %687
    %v691 = vsel %vm68, %v651, 0
    %v694 = vsel %vm68, %v652, 0
    %v697 = vsel %vm68, %v653, 0
    %v700 = vsel %vm68, %v654, 0
    %702 = vmatprep.subr.mxu0 %v631
    %703 = vmatpush1.msra.mxu0 %v630
    %704 = vmatprep.subr.mxu0 %v633
    %705 = vmatpush1.msra.mxu0 %v632
    %706 = vmatprep.subr.mxu0 0.0
    %707 = vmatpush1.msra.mxu0 0.0
    %708 = vmatprep.subr.mxu0 0.0
    %709 = vmatpush1.msra.mxu0 0.0
    %710 = vmatprep.subr.mxu0 0.0
    %711 = vmatpush1.msra.mxu0 0.0
    %712 = vmatprep.subr.mxu0 0.0
    %713 = vmatpush1.msra.mxu0 0.0
    %714 = vmatprep.subr.mxu0 0.0
    %715 = vmatpush1.msra.mxu0 0.0
    %716 = vmatprep.subr.mxu0 0.0
    %717 = vmatpush1.msra.mxu0 0.0
    %718 = vmatprep.subr.mxu0 0.0
    %719 = vmatpush1.msra.mxu0 0.0
    %720 = vmatprep.subr.mxu0 0.0
    %721 = vmatpush1.msra.mxu0 0.0
    %722 = vmatprep.subr.mxu0 0.0
    %723 = vmatpush1.msra.mxu0 0.0
    %724 = vmatprep.subr.mxu0 0.0
    %725 = vmatpush1.msra.mxu0 0.0
    %726 = vmatprep.subr.mxu0 0.0
    %727 = vmatpush1.msra.mxu0 0.0
    %728 = vmatprep.subr.mxu0 0.0
    %729 = vmatpush1.msra.mxu0 0.0
    %730 = vmatprep.subr.mxu0 0.0
    %731 = vmatpush1.msra.mxu0 0.0
    %732 = vmatprep.subr.mxu0 0.0
    %733 = vmatpush1.msra.mxu0 0.0
    %734 = vmatprep.subr.mxu0 0.0
    %735 = vmatpush1.msra.mxu0 0.0
    %736 = vmatprep.subr.mxu0 0.0
    %737 = vmatpush1.msra.mxu0 0.0
    %738 = vmatprep.subr.mxu0 0.0
    %739 = vmatpush1.msra.mxu0 0.0
    %740 = vmatprep.subr.mxu0 0.0
    %741 = vmatpush1.msra.mxu0 0.0
    %742 = vmatprep.subr.mxu0 0.0
    %743 = vmatpush1.msra.mxu0 0.0
    %744 = vmatprep.subr.mxu0 0.0
    %745 = vmatpush1.msra.mxu0 0.0
    %746 = vmatprep.subr.mxu0 0.0
    %747 = vmatpush1.msra.mxu0 0.0
    %748 = vmatprep.subr.mxu0 0.0
    %749 = vmatpush1.msra.mxu0 0.0
    %750 = vmatprep.subr.mxu0 0.0
    %751 = vmatpush1.msra.mxu0 0.0
    %752 = vmatprep.subr.mxu0 0.0
    %753 = vmatpush1.msra.mxu0 0.0
    %754 = vmatprep.subr.mxu0 0.0
    %755 = vmatpush1.msra.mxu0 0.0
    %756 = vmatprep.subr.mxu0 0.0
    %757 = vmatpush1.msra.mxu0 0.0
    %758 = vmatprep.subr.mxu0 0.0
    %759 = vmatpush1.msra.mxu0 0.0
    %760 = vmatprep.subr.mxu0 0.0
    %761 = vmatpush1.msra.mxu0 0.0
    %762 = vmatprep.subr.mxu0 0.0
    %763 = vmatpush1.msra.mxu0 0.0
    %764 = vmatprep.subr.mxu0 0.0
    %765 = vmatpush1.msra.mxu0 0.0
    %766 = vmatprep.mubr.f32.mxu0 0.0
    %767 = vmatmul.mubr.f32.gmra.mrb[0].mxu0 %v691
    %v768 = vpop.f32.mrb[0].mxu0
    %v769 = vadd.f32 %v673, %v768
    %v770 = vpop.f32.mrb[0].mxu0
    %v771 = vadd.f32 %v673, %v770
    %772 = vmatprep.mubr.f32.mxu0 0.0
    %773 = vmatmul.mubr.f32.gmra.mrb[0].mxu0 %v694
    %v774 = vpop.f32.mrb[0].mxu0
    %v775 = vadd.f32 %v678, %v774
    %v776 = vpop.f32.mrb[0].mxu0
    %v777 = vadd.f32 %v678, %v776
    %778 = vmatprep.mubr.f32.mxu0 0.0
    %779 = vmatmul.mubr.f32.gmra.mrb[0].mxu0 %v697
    %v780 = vpop.f32.mrb[0].mxu0
    %v781 = vadd.f32 %v683, %v780
    %v782 = vpop.f32.mrb[0].mxu0
    %v783 = vadd.f32 %v683, %v782
    %784 = vmatprep.mubr.f32.mxu0 0.0
    %785 = vmatmul.mubr.f32.gmra.mrb[0].mxu0 %v700
    %v786 = vpop.f32.mrb[0].mxu0
    %v787 = vadd.f32 %v688, %v786
    %v788 = vpop.f32.mrb[0].mxu0
    %v789 = vadd.f32 %v688, %v788
    %790 = vdwg.mxu0
    %v791 = vmax.f32 %v769, 0.0
    %v792 = vmax.f32 %v771, 0.0
    %v793 = vmax.f32 %v775, 0.0
    %v794 = vmax.f32 %v777, 0.0
    %v795 = vmax.f32 %v781, 0.0
    %v796 = vmax.f32 %v783, 0.0
    %v797 = vmax.f32 %v787, 0.0
    %v798 = vmax.f32 %v789, 0.0
    %800 = vset.pattern.permute.xlu0 0
    %801 = vperm.xlu0 %800, %v666
    %v802 = vpop.permute.xlu0 %801
    %805 = vset.pattern.permute.xlu0 0
    %806 = vperm.xlu0 %805, %v667
    %v807 = vpop.permute.xlu0 %806
    %810 = vset.pattern.permute.xlu0 0
    %811 = vperm.xlu0 %810, %v668
    %v812 = vpop.permute.xlu0 %811
    %815 = vset.pattern.permute.xlu0 0
    %816 = vperm.xlu0 %815, %v669
    %v817 = vpop.permute.xlu0 %816
    %v820 = vsel %vm198, %v661, 0
    %v823 = vsel %vm198, %v662, 0
    %v826 = vsel %vm198, %v663, 0
    %v829 = vsel %vm198, %v664, 0
    %831 = vmatprep.subr.mxu0 %v792
    %832 = vmatpush1.msra.mxu0 %v791
    %833 = vmatprep.subr.mxu0 %v794
    %834 = vmatpush1.msra.mxu0 %v793
    %835 = vmatprep.subr.mxu0 %v796
    %836 = vmatpush1.msra.mxu0 %v795
    %837 = vmatprep.subr.mxu0 %v798
    %838 = vmatpush1.msra.mxu0 %v797
    %839 = vmatprep.subr.mxu0 0.0
    %840 = vmatpush1.msra.mxu0 0.0
    %841 = vmatprep.subr.mxu0 0.0
    %842 = vmatpush1.msra.mxu0 0.0
    %843 = vmatprep.subr.mxu0 0.0
    %844 = vmatpush1.msra.mxu0 0.0
    %845 = vmatprep.subr.mxu0 0.0
    %846 = vmatpush1.msra.mxu0 0.0
    %847 = vmatprep.subr.mxu0 0.0
    %848 = vmatpush1.msra.mxu0 0.0
    %849 = vmatprep.subr.mxu0 0.0
    %850 = vmatpush1.msra.mxu0 0.0
    %851 = vmatprep.subr.mxu0 0.0
    %852 = vmatpush1.msra.mxu0 0.0
    %853 = vmatprep.subr.mxu0 0.0
    %854 = vmatpush1.msra.mxu0 0.0
    %855 = vmatprep.subr.mxu0 0.0
    %856 = vmatpush1.msra.mxu0 0.0
    %857 = vmatprep.subr.mxu0 0.0
    %858 = vmatpush1.msra.mxu0 0.0
    %859 = vmatprep.subr.mxu0 0.0
    %860 = vmatpush1.msra.mxu0 0.0
    %861 = vmatprep.subr.mxu0 0.0
    %862 = vmatpush1.msra.mxu0 0.0
    %863 = vmatprep.subr.mxu0 0.0
    %864 = vmatpush1.msra.mxu0 0.0
    %865 = vmatprep.subr.mxu0 0.0
    %866 = vmatpush1.msra.mxu0 0.0
    %867 = vmatprep.subr.mxu0 0.0
    %868 = vmatpush1.msra.mxu0 0.0
    %869 = vmatprep.subr.mxu0 0.0
    %870 = vmatpush1.msra.mxu0 0.0
    %871 = vmatprep.subr.mxu0 0.0
    %872 = vmatpush1.msra.mxu0 0.0
    %873 = vmatprep.subr.mxu0 0.0
    %874 = vmatpush1.msra.mxu0 0.0
    %875 = vmatprep.subr.mxu0 0.0
    %876 = vmatpush1.msra.mxu0 0.0
    %877 = vmatprep.subr.mxu0 0.0
    %878 = vmatpush1.msra.mxu0 0.0
    %879 = vmatprep.subr.mxu0 0.0
    %880 = vmatpush1.msra.mxu0 0.0
    %881 = vmatprep.subr.mxu0 0.0
    %882 = vmatpush1.msra.mxu0 0.0
    %883 = vmatprep.subr.mxu0 0.0
    %884 = vmatpush1.msra.mxu0 0.0
    %885 = vmatprep.subr.mxu0 0.0
    %886 = vmatpush1.msra.mxu0 0.0
    %887 = vmatprep.subr.mxu0 0.0
    %888 = vmatpush1.msra.mxu0 0.0
    %889 = vmatprep.subr.mxu0 0.0
    %890 = vmatpush1.msra.mxu0 0.0
    %891 = vmatprep.subr.mxu0 0.0
    %892 = vmatpush1.msra.mxu0 0.0
    %893 = vmatprep.subr.mxu0 0.0
    %894 = vmatpush1.msra.mxu0 0.0
    %895 = vmatprep.mubr.f32.mxu0 0.0
    %896 = vmatmul.mubr.f32.gmra.mrb[0].mxu0 %v820
    %v897 = vpop.f32.mrb[0].mxu0
    %v898 = vadd.f32 %v802, %v897
    %v899 = vpop.f32.mrb[0].mxu0
    %v900 = vadd.f32 %v802, %v899
    %901 = vmatprep.mubr.f32.mxu0 0.0
    %902 = vmatmul.mubr.f32.gmra.mrb[0].mxu0 %v823
    %v903 = vpop.f32.mrb[0].mxu0
    %v904 = vadd.f32 %v807, %v903
    %v905 = vpop.f32.mrb[0].mxu0
    %v906 = vadd.f32 %v807, %v905
    %907 = vmatprep.mubr.f32.mxu0 0.0
    %908 = vmatmul.mubr.f32.gmra.mrb[0].mxu0 %v826
    %v909 = vpop.f32.mrb[0].mxu0
    %v910 = vadd.f32 %v812, %v909
    %v911 = vpop.f32.mrb[0].mxu0
    %v912 = vadd.f32 %v812, %v911
    %913 = vmatprep.mubr.f32.mxu0 0.0
    %914 = vmatmul.mubr.f32.gmra.mrb[0].mxu0 %v829
    %v915 = vpop.f32.mrb[0].mxu0
    %v916 = vadd.f32 %v817, %v915
    %v917 = vpop.f32.mrb[0].mxu0
    %v918 = vadd.f32 %v817, %v917
    %919 = vdwg.mxu0
    %v920 = vtanh.pop %v898
    %v921 = vtanh.pop %v900
    %v922 = vtanh.pop %v904
    %v923 = vtanh.pop %v906
    %v924 = vmul.f32 %v920, 2.0
    %v925 = vmul.f32 %v921, 2.0
    %v926 = vmul.f32 %v922, 2.0
    %v927 = vmul.f32 %v923, 2.0
    %v928 = vmul.f32 %v924, 1.442695
    %v929 = vpow.pop %v928
    %v930 = vmul.f32 %v925, 1.442695
    %v931 = vpow.pop %v930
    %v932 = vmul.f32 %v926, 1.442695
    %v933 = vpow.pop %v932
    %v934 = vmul.f32 %v927, 1.442695
    %v935 = vpow.pop %v934
    %v936 = vmul.f32 %v320, %v929
    %v937 = vmul.f32 %v321, %v931
    %v938 = vmul.f32 %v322, %v933
    %v939 = vmul.f32 %v323, %v935
    %v940 = vadd.f32 %v936, %v910
    %v941 = vadd.f32 %v937, %v912
    %v942 = vadd.f32 %v938, %v916
    %v943 = vadd.f32 %v939, %v918
    %v944 = vadd.f32 %v924, %v926
    %v945 = vrot.slane %v944, 4
    %v946 = vadd.f32 %v944, %v945
    %v947 = vrot.slane %v946, 2
    %v948 = vadd.f32 %v946, %v947
    %v949 = vrot.slane %v948, 1
    %v950 = vadd.f32 %v948, %v949
    %v951 = vadd.f32 %v925, %v927
    %v952 = vrot.slane %v951, 4
    %v953 = vadd.f32 %v951, %v952
    %v954 = vrot.slane %v953, 2
    %v955 = vadd.f32 %v953, %v954
    %v956 = vrot.slane %v955, 1
    %v957 = vadd.f32 %v955, %v956
    %v958 = vadd.f32 %v648, %v950
    %v959 = vadd.f32 %v649, %v957
    %s960 = scalar_lea.vmem %s1, 96
    %v961 = vld [vmem:[%s960] sm:$0xff]
    %v962 = vld [vmem:[%s960 + $0x8] sm:$0xff]
    %v963 = vld [vmem:[%s960 + $0x10] sm:$0xff]
    %v964 = vld [vmem:[%s960 + $0x18] sm:$0xff]
    %s965 = scalar_lea.vmem %s2, 96
    %v966 = vld [vmem:[%s965] sm:$0xff]
    %v967 = vld [vmem:[%s965 + $0x8] sm:$0xff]
    %v968 = vld [vmem:[%s965 + $0x10] sm:$0xff]
    %v969 = vld [vmem:[%s965 + $0x18] sm:$0xff]
    %s970 = scalar_lea.vmem %s3, 96
    %v971 = vld [vmem:[%s970] sm:$0xff]
    %v972 = vld [vmem:[%s970 + $0x8] sm:$0xff]
    %v973 = vld [vmem:[%s970 + $0x10] sm:$0xff]
    %v974 = vld [vmem:[%s970 + $0x18] sm:$0xff]
    %s975 = scalar_lea.vmem %s4, 96
    %v976 = vld [vmem:[%s975] sm:$0xff]
    %v977 = vld [vmem:[%s975 + $0x8] sm:$0xff]
    %v978 = vld [vmem:[%s975 + $0x10] sm:$0xff]
    %v979 = vld [vmem:[%s975 + $0x18] sm:$0xff]
    %981 = vset.pattern.permute.xlu0 0
    %982 = vperm.xlu0 %981, %v966
    %v983 = vpop.permute.xlu0 %982
    %986 = vset.pattern.permute.xlu0 0
    %987 = vperm.xlu0 %986, %v967
    %v988 = vpop.permute.xlu0 %987
    %991 = vset.pattern.permute.xlu0 0
    %992 = vperm.xlu0 %991, %v968
    %v993 = vpop.permute.xlu0 %992
    %996 = vset.pattern.permute.xlu0 0
    %997 = vperm.xlu0 %996, %v969
    %v998 = vpop.permute.xlu0 %997
    %v1001 = vsel %vm68, %v961, 0
    %v1004 = vsel %vm68, %v962, 0
    %v1007 = vsel %vm68, %v963, 0
    %v1010 = vsel %vm68, %v964, 0
    %1012 = vmatprep.subr.mxu0 %v941
    %1013 = vmatpush1.msra.mxu0 %v940
    %1014 = vmatprep.subr.mxu0 %v943
    %1015 = vmatpush1.msra.mxu0 %v942
    %1016 = vmatprep.subr.mxu0 0.0
    %1017 = vmatpush1.msra.mxu0 0.0
    %1018 = vmatprep.subr.mxu0 0.0
    %1019 = vmatpush1.msra.mxu0 0.0
    %1020 = vmatprep.subr.mxu0 0.0
    %1021 = vmatpush1.msra.mxu0 0.0
    %1022 = vmatprep.subr.mxu0 0.0
    %1023 = vmatpush1.msra.mxu0 0.0
    %1024 = vmatprep.subr.mxu0 0.0
    %1025 = vmatpush1.msra.mxu0 0.0
    %1026 = vmatprep.subr.mxu0 0.0
    %1027 = vmatpush1.msra.mxu0 0.0
    %1028 = vmatprep.subr.mxu0 0.0
    %1029 = vmatpush1.msra.mxu0 0.0
    %1030 = vmatprep.subr.mxu0 0.0
    %1031 = vmatpush1.msra.mxu0 0.0
    %1032 = vmatprep.subr.mxu0 0.0
    %1033 = vmatpush1.msra.mxu0 0.0
    %1034 = vmatprep.subr.mxu0 0.0
    %1035 = vmatpush1.msra.mxu0 0.0
    %1036 = vmatprep.subr.mxu0 0.0
    %1037 = vmatpush1.msra.mxu0 0.0
    %1038 = vmatprep.subr.mxu0 0.0
    %1039 = vmatpush1.msra.mxu0 0.0
    %1040 = vmatprep.subr.mxu0 0.0
    %1041 = vmatpush1.msra.mxu0 0.0
    %1042 = vmatprep.subr.mxu0 0.0
    %1043 = vmatpush1.msra.mxu0 0.0
    %1044 = vmatprep.subr.mxu0 0.0
    %1045 = vmatpush1.msra.mxu0 0.0
    %1046 = vmatprep.subr.mxu0 0.0
    %1047 = vmatpush1.msra.mxu0 0.0
    %1048 = vmatprep.subr.mxu0 0.0
    %1049 = vmatpush1.msra.mxu0 0.0
    %1050 = vmatprep.subr.mxu0 0.0
    %1051 = vmatpush1.msra.mxu0 0.0
    %1052 = vmatprep.subr.mxu0 0.0
    %1053 = vmatpush1.msra.mxu0 0.0
    %1054 = vmatprep.subr.mxu0 0.0
    %1055 = vmatpush1.msra.mxu0 0.0
    %1056 = vmatprep.subr.mxu0 0.0
    %1057 = vmatpush1.msra.mxu0 0.0
    %1058 = vmatprep.subr.mxu0 0.0
    %1059 = vmatpush1.msra.mxu0 0.0
    %1060 = vmatprep.subr.mxu0 0.0
    %1061 = vmatpush1.msra.mxu0 0.0
    %1062 = vmatprep.subr.mxu0 0.0
    %1063 = vmatpush1.msra.mxu0 0.0
    %1064 = vmatprep.subr.mxu0 0.0
    %1065 = vmatpush1.msra.mxu0 0.0
    %1066 = vmatprep.subr.mxu0 0.0
    %1067 = vmatpush1.msra.mxu0 0.0
    %1068 = vmatprep.subr.mxu0 0.0
    %1069 = vmatpush1.msra.mxu0 0.0
    %1070 = vmatprep.subr.mxu0 0.0
    %1071 = vmatpush1.msra.mxu0 0.0
    %1072 = vmatprep.subr.mxu0 0.0
    %1073 = vmatpush1.msra.mxu0 0.0
    %1074 = vmatprep.subr.mxu0 0.0
    %1075 = vmatpush1.msra.mxu0 0.0
    %1076 = vmatprep.mubr.f32.mxu0 0.0
    %1077 = vmatmul.mubr.f32.gmra.mrb[0].mxu0 %v1001
    %v1078 = vpop.f32.mrb[0].mxu0
    %v1079 = vadd.f32 %v983, %v1078
    %v1080 = vpop.f32.mrb[0].mxu0
    %v1081 = vadd.f32 %v983, %v1080
    %1082 = vmatprep.mubr.f32.mxu0 0.0
    %1083 = vmatmul.mubr.f32.gmra.mrb[0].mxu0 %v1004
    %v1084 = vpop.f32.mrb[0].mxu0
    %v1085 = vadd.f32 %v988, %v1084
    %v1086 = vpop.f32.mrb[0].mxu0
    %v1087 = vadd.f32 %v988, %v1086
    %1088 = vmatprep.mubr.f32.mxu0 0.0
    %1089 = vmatmul.mubr.f32.gmra.mrb[0].mxu0 %v1007
    %v1090 = vpop.f32.mrb[0].mxu0
    %v1091 = vadd.f32 %v993, %v1090
    %v1092 = vpop.f32.mrb[0].mxu0
    %v1093 = vadd.f32 %v993, %v1092
    %1094 = vmatprep.mubr.f32.mxu0 0.0
    %1095 = vmatmul.mubr.f32.gmra.mrb[0].mxu0 %v1010
    %v1096 = vpop.f32.mrb[0].mxu0
    %v1097 = vadd.f32 %v998, %v1096
    %v1098 = vpop.f32.mrb[0].mxu0
    %v1099 = vadd.f32 %v998, %v1098
    %1100 = vdwg.mxu0
    %v1101 = vmax.f32 %v1079, 0.0
    %v1102 = vmax.f32 %v1081, 0.0
    %v1103 = vmax.f32 %v1085, 0.0
    %v1104 = vmax.f32 %v1087, 0.0
    %v1105 = vmax.f32 %v1091, 0.0
    %v1106 = vmax.f32 %v1093, 0.0
    %v1107 = vmax.f32 %v1097, 0.0
    %v1108 = vmax.f32 %v1099, 0.0
    %1110 = vset.pattern.permute.xlu0 0
    %1111 = vperm.xlu0 %1110, %v976
    %v1112 = vpop.permute.xlu0 %1111
    %1115 = vset.pattern.permute.xlu0 0
    %1116 = vperm.xlu0 %1115, %v977
    %v1117 = vpop.permute.xlu0 %1116
    %1120 = vset.pattern.permute.xlu0 0
    %1121 = vperm.xlu0 %1120, %v978
    %v1122 = vpop.permute.xlu0 %1121
    %1125 = vset.pattern.permute.xlu0 0
    %1126 = vperm.xlu0 %1125, %v979
    %v1127 = vpop.permute.xlu0 %1126
    %v1130 = vsel %vm198, %v971, 0
    %v1133 = vsel %vm198, %v972, 0
    %v1136 = vsel %vm198, %v973, 0
    %v1139 = vsel %vm198, %v974, 0
    %1141 = vmatprep.subr.mxu0 %v1102
    %1142 = vmatpush1.msra.mxu0 %v1101
    %1143 = vmatprep.subr.mxu0 %v1104
    %1144 = vmatpush1.msra.mxu0 %v1103
    %1145 = vmatprep.subr.mxu0 %v1106
    %1146 = vmatpush1.msra.mxu0 %v1105
    %1147 = vmatprep.subr.mxu0 %v1108
    %1148 = vmatpush1.msra.mxu0 %v1107
    %1149 = vmatprep.subr.mxu0 0.0
    %1150 = vmatpush1.msra.mxu0 0.0
    %1151 = vmatprep.subr.mxu0 0.0
    %1152 = vmatpush1.msra.mxu0 0.0
    %1153 = vmatprep.subr.mxu0 0.0
    %1154 = vmatpush1.msra.mxu0 0.0
    %1155 = vmatprep.subr.mxu0 0.0
    %1156 = vmatpush1.msra.mxu0 0.0
    %1157 = vmatprep.subr.mxu0 0.0
    %1158 = vmatpush1.msra.mxu0 0.0
    %1159 = vmatprep.subr.mxu0 0.0
    %1160 = vmatpush1.msra.mxu0 0.0
    %1161 = vmatprep.subr.mxu0 0.0
    %1162 = vmatpush1.msra.mxu0 0.0
    %1163 = vmatprep.subr.mxu0 0.0
    %1164 = vmatpush1.msra.mxu0 0.0
    %1165 = vmatprep.subr.mxu0 0.0
    %1166 = vmatpush1.msra.mxu0 0.0
    %1167 = vmatprep.subr.mxu0 0.0
    %1168 = vmatpush1.msra.mxu0 0.0
    %1169 = vmatprep.subr.mxu0 0.0
    %1170 = vmatpush1.msra.mxu0 0.0
    %1171 = vmatprep.subr.mxu0 0.0
    %1172 = vmatpush1.msra.mxu0 0.0
    %1173 = vmatprep.subr.mxu0 0.0
    %1174 = vmatpush1.msra.mxu0 0.0
    %1175 = vmatprep.subr.mxu0 0.0
    %1176 = vmatpush1.msra.mxu0 0.0
    %1177 = vmatprep.subr.mxu0 0.0
    %1178 = vmatpush1.msra.mxu0 0.0
    %1179 = vmatprep.subr.mxu0 0.0
    %1180 = vmatpush1.msra.mxu0 0.0
    %1181 = vmatprep.subr.mxu0 0.0
    %1182 = vmatpush1.msra.mxu0 0.0
    %1183 = vmatprep.subr.mxu0 0.0
    %1184 = vmatpush1.msra.mxu0 0.0
    %1185 = vmatprep.subr.mxu0 0.0
    %1186 = vmatpush1.msra.mxu0 0.0
    %1187 = vmatprep.subr.mxu0 0.0
    %1188 = vmatpush1.msra.mxu0 0.0
    %1189 = vmatprep.subr.mxu0 0.0
    %1190 = vmatpush1.msra.mxu0 0.0
    %1191 = vmatprep.subr.mxu0 0.0
    %1192 = vmatpush1.msra.mxu0 0.0
    %1193 = vmatprep.subr.mxu0 0.0
    %1194 = vmatpush1.msra.mxu0 0.0
    %1195 = vmatprep.subr.mxu0 0.0
    %1196 = vmatpush1.msra.mxu0 0.0
    %1197 = vmatprep.subr.mxu0 0.0
    %1198 = vmatpush1.msra.mxu0 0.0
    %1199 = vmatprep.subr.mxu0 0.0
    %1200 = vmatpush1.msra.mxu0 0.0
    %1201 = vmatprep.subr.mxu0 0.0
    %1202 = vmatpush1.msra.mxu0 0.0
    %1203 = vmatprep.subr.mxu0 0.0
    %1204 = vmatpush1.msra.mxu0 0.0
    %1205 = vmatprep.mubr.f32.mxu0 0.0
    %1206 = vmatmul.mubr.f32.gmra.mrb[0].mxu0 %v1130
    %v1207 = vpop.f32.mrb[0].mxu0
    %v1208 = vadd.f32 %v1112, %v1207
    %v1209 = vpop.f32.mrb[0].mxu0
    %v1210 = vadd.f32 %v1112, %v1209
    %1211 = vmatprep.mubr.f32.mxu0 0.0
    %1212 = vmatmul.mubr.f32.gmra.mrb[0].mxu0 %v1133
    %v1213 = vpop.f32.mrb[0].mxu0
    %v1214 = vadd.f32 %v1117, %v1213
    %v1215 = vpop.f32.mrb[0].mxu0
    %v1216 = vadd.f32 %v1117, %v1215
    %1217 = vmatprep.mubr.f32.mxu0 0.0
    %1218 = vmatmul.mubr.f32.gmra.mrb[0].mxu0 %v1136
    %v1219 = vpop.f32.mrb[0].mxu0
    %v1220 = vadd.f32 %v1122, %v1219
    %v1221 = vpop.f32.mrb[0].mxu0
    %v1222 = vadd.f32 %v1122, %v1221
    %1223 = vmatprep.mubr.f32.mxu0 0.0
    %1224 = vmatmul.mubr.f32.gmra.mrb[0].mxu0 %v1139
    %v1225 = vpop.f32.mrb[0].mxu0
    %v1226 = vadd.f32 %v1127, %v1225
    %v1227 = vpop.f32.mrb[0].mxu0
    %v1228 = vadd.f32 %v1127, %v1227
    %1229 = vdwg.mxu0
    %v1230 = vtanh.pop %v1208
    %v1231 = vtanh.pop %v1210
    %v1232 = vtanh.pop %v1214
    %v1233 = vtanh.pop %v1216
    %v1234 = vmul.f32 %v1230, 2.0
    %v1235 = vmul.f32 %v1231, 2.0
    %v1236 = vmul.f32 %v1232, 2.0
    %v1237 = vmul.f32 %v1233, 2.0
    %v1238 = vmul.f32 %v1234, 1.442695
    %v1239 = vpow.pop %v1238
    %v1240 = vmul.f32 %v1235, 1.442695
    %v1241 = vpow.pop %v1240
    %v1242 = vmul.f32 %v1236, 1.442695
    %v1243 = vpow.pop %v1242
    %v1244 = vmul.f32 %v1237, 1.442695
    %v1245 = vpow.pop %v1244
    %v1246 = vmul.f32 %v630, %v1239
    %v1247 = vmul.f32 %v631, %v1241
    %v1248 = vmul.f32 %v632, %v1243
    %v1249 = vmul.f32 %v633, %v1245
    %v1250 = vadd.f32 %v1246, %v1220
    %v1251 = vadd.f32 %v1247, %v1222
    %v1252 = vadd.f32 %v1248, %v1226
    %v1253 = vadd.f32 %v1249, %v1228
    %v1254 = vadd.f32 %v1234, %v1236
    %v1255 = vrot.slane %v1254, 4
    %v1256 = vadd.f32 %v1254, %v1255
    %v1257 = vrot.slane %v1256, 2
    %v1258 = vadd.f32 %v1256, %v1257
    %v1259 = vrot.slane %v1258, 1
    %v1260 = vadd.f32 %v1258, %v1259
    %v1261 = vadd.f32 %v1235, %v1237
    %v1262 = vrot.slane %v1261, 4
    %v1263 = vadd.f32 %v1261, %v1262
    %v1264 = vrot.slane %v1263, 2
    %v1265 = vadd.f32 %v1263, %v1264
    %v1266 = vrot.slane %v1265, 1
    %v1267 = vadd.f32 %v1265, %v1266
    %v1268 = vadd.f32 %v958, %v1260
    %v1269 = vadd.f32 %v959, %v1267
    %1270 = vst [vmem:[#allocation2] sm:$0xff] %v1250
    %1271 = vst [vmem:[#allocation2 + $0x8] sm:$0xff] %v1251
    %1272 = vst [vmem:[#allocation2 + $0x10] sm:$0xff] %v1252
    %1273 = vst [vmem:[#allocation2 + $0x18] sm:$0xff] %v1253
    %1274 = vst [vmem:[#allocation2 + $0x20] sm:$0xff] %v940
    %1275 = vst [vmem:[#allocation2 + $0x28] sm:$0xff] %v941
    %1276 = vst [vmem:[#allocation2 + $0x30] sm:$0xff] %v942
    %1277 = vst [vmem:[#allocation2 + $0x38] sm:$0xff] %v943
    %v1280 = vcombine.low %v1268, %v1269
    %v1282 = vunpack.c.l.s4 1966171168
    %v1283 = vunpack.c.0.s8 %v1282
    %v1284 = vlaneseq
    %v1285 = vshrl.u32 %v1284, 7
    %v1286 = vsub.s32 %v1283, %v1285
    %v1287 = vrot.slane %v1280, %v1286
    %v1289 = vunpack.c.l.s4 1966171168
    %v1290 = vunpack.c.0.s8 %v1289
    %v1291 = vlaneseq
    %v1292 = vshrl.u32 %v1291, 7
    %v1293 = vsub.s32 %v1290, %v1292
    %v1294 = vrot.slane %v1287, %v1293
    %v1296 = vlaneseq
    %vm1297 = vcmp.ge.s32.totalorder %v1296, 0
    %vm1298 = vcmp.lt.s32.totalorder %v1296, 256
    %vm1299 = vmand %vm1297, %vm1298
    %1300 = vst.msk [vmem:[#allocation4] sm:$0x3] %vm1299, %v1294
    // Predicated region
    $region22: #{tpu_custom_call.1} parent=1 // pred_check
      _
    $region23: #{tpu_custom_call.1} parent=1 // pred_check_branch
      %1302 = sbr.rel (0) target = $region25
    $region24: #{tpu_custom_call.1} parent=1 // pred_region
      %s1304 = ssub.s32 1024, 1024
      %1305 = vsyncadd [#allocation3], %s1304
      %s1306 = sshll.u32 [#allocation2], 4
      %s1307 = int_to_ptr.vmem [resolvable:$true] %s1306
      %1312 = dma.vmem_to_hbm [thread:$0]  %s1307, 1024, %s5, [#allocation3], 256, 256, 16
    $region25: #{tpu_custom_call.1} parent=1 // pred_fallthru
      _
    // Predicated region
    $region26: #{tpu_custom_call.1} parent=1 // pred_check
      _
    $region27: #{tpu_custom_call.1} parent=1 // pred_check_branch
      %1314 = sbr.rel (0) target = $region29
    $region28: #{tpu_custom_call.1} parent=1 // pred_region
      %s1316 = ssub.s32 32, 32
      %1317 = vsyncadd [#allocation5], %s1316
      %s1319 = sshll.u32 [#allocation4], 4
      %s1320 = int_to_ptr.vmem [resolvable:$true] %s1319
      %1322 = dma.vmem_to_hbm [thread:$0]  %s1320, 32, %s6, [#allocation5]
    $region29: #{tpu_custom_call.1} parent=1 // pred_fallthru
      _
    // Predicated region
    $region30: #{tpu_custom_call.1} parent=1 // pred_check
      _
    $region31: #{tpu_custom_call.1} parent=1 // pred_check_branch
      %1324 = sbr.rel (0) target = $region33
    $region32: #{tpu_custom_call.1} parent=1 // pred_region
      %1325 = dma.done [#allocation3], 1024
    $region33: #{tpu_custom_call.1} parent=1 // pred_fallthru
      _
    // Predicated region
    $region34: #{tpu_custom_call.1} parent=1 // pred_check
      _
    $region35: #{tpu_custom_call.1} parent=1 // pred_check_branch
      %1327 = sbr.rel (0) target = $region37
    $region36: #{tpu_custom_call.1} parent=1 // pred_region
      %1328 = dma.done [#allocation5], 32
    $region37: #{tpu_custom_call.1} parent=1 // pred_fallthru
      _
    %1329 = vsyncpa [#allocation3], 1
    %1330 = vsyncpa [#allocation5], 1

</llo_original>
